<compile_context>
chip_gen: v7x
topology: tpu7x:2x2x1
jax: 0.10.0
libtpu: 0.0.40
codegen_flags: <defaults>
</compile_context>

<pallas_src>
import functools

import jax
import jax.numpy as jnp
import numpy as np
from jax.experimental import pallas as pl
from jax.experimental.pallas import tpu as pltpu


def _round_up(x, m):
    return ((x + m - 1) // m) * m


def _vmem_capacity_bytes():
    """Physical VMEM of the local chip; conservative fallback if unqueryable."""
    try:
        return int(pltpu.get_tpu_info().vmem_capacity_bytes)
    except Exception:
        return 64 << 20   # smallest per-TC VMEM (v7x) -> always a safe cap


# --------------------------------------------------------------------------
# Kernels
# --------------------------------------------------------------------------
def _resident_kernel(x_ref, w_ref, b_ref, out_ref, state_ref, *,
                     n_inputs, n_hidden, x_pad, out_col0):
    """All layers resident in VMEM; fully unrolled with static triangular slices.

    x_ref:     (bm, X_pad)              f32  -- x in cols [0, n_inputs), zeros after
    w_ref:     (n_hidden, T_pad, T_pad) bf16 -- zero-padded transposed weights
    b_ref:     (n_hidden, 1, T_pad)     f32  -- zero-padded biases
    out_ref:   (bm, T_pad - out_col0)   f32  -- trailing lane-tiles of the state
    state_ref: (bm, T_pad)              f32  -- scratch accumulator
    """
    T_pad = state_ref.shape[1]
    state_ref[...] = jnp.zeros_like(state_ref)
    state_ref[:, :x_pad] = x_ref[...]
    for i in range(n_hidden):                      # static unroll (n_hidden small)
        L = n_inputs + i
        K = min(T_pad, _round_up(L, 128))          # rows of W_i that can be nonzero
        N0 = (L // 128) * 128                      # first lane-tile W_i writes into
        pre = jnp.dot(state_ref[:, :K].astype(jnp.bfloat16),
                      w_ref[i, :K, N0:],
                      preferred_element_type=jnp.float32) + b_ref[i, :, N0:]
        # Zero weight rows >= L, zero cols < L and relu(0)=0 make cols outside
        # [L, total) contribute exactly 0, so a plain add == the masked update.
        state_ref[:, N0:] = state_ref[:, N0:] + jnp.maximum(pre, 0.0)
    out_ref[...] = state_ref[:, out_col0:]


def _stream_kernel(x_ref, w_ref, b_ref, out_ref, acc_ref, *, x_pad, out_col0):
    """One layer per grid step (layer axis last, 'arbitrary'); state in scratch."""
    i = pl.program_id(1)

    @pl.when(i == 0)
    def _():
        acc_ref[...] = jnp.zeros_like(acc_ref)
        acc_ref[:, :x_pad] = x_ref[...]

    pre = jnp.dot(acc_ref[...].astype(jnp.bfloat16), w_ref[0],
                  preferred_element_type=jnp.float32) + b_ref[0]
    acc_ref[...] = acc_ref[...] + jnp.maximum(pre, 0.0)

    @pl.when(i == pl.num_programs(1) - 1)
    def _():
        out_ref[...] = acc_ref[:, out_col0:]


# --------------------------------------------------------------------------
# One-time parameter packing (hoisted out of the hot path)
# --------------------------------------------------------------------------
def pack_dense_jungle_params(weights, biases, *, n_inputs, n_outputs, n_hidden):
    """weights[i]: (n_outputs+n_hidden-i, n_inputs+i); biases[i]: (out_i,)."""
    total = n_inputs + n_hidden + n_outputs
    T_pad = _round_up(total, 128)
    w_pad = np.zeros((n_hidden, T_pad, T_pad), np.float32)
    b_pad = np.zeros((n_hidden, 1, T_pad), np.float32)
    for i in range(n_hidden):
        L = n_inputs + i
        w_pad[i, :L, L:total] = np.asarray(weights[i], np.float32).T
        b_pad[i, 0, L:total] = np.asarray(biases[i], np.float32)
    return jnp.asarray(w_pad, jnp.bfloat16), jnp.asarray(b_pad, jnp.float32)


# --------------------------------------------------------------------------
# Jittable forward
# --------------------------------------------------------------------------
@functools.partial(
    jax.jit,
    static_argnames=("n_inputs", "n_outputs", "n_hidden", "force_streaming"))
def dense_jungle_forward(x, w_pad, b_pad, *, n_inputs, n_outputs, n_hidden,
                         force_streaming=False):
    """x: (batch, n_inputs) f32; w_pad/b_pad from pack_dense_jungle_params."""
    batch = x.shape[0]
    total = n_inputs + n_hidden + n_outputs
    T_pad = _round_up(total, 128)
    X_pad = min(T_pad, _round_up(n_inputs, 128))       # lane-dense x slab width
    O0 = ((total - n_outputs) // 128) * 128            # first output lane-tile
    O_w = T_pad - O0                                   # output slab width

    cap = int(0.85 * _vmem_capacity_bytes())           # per-generation VMEM ceiling

    # --- batch tiling: >=2 tiles when batch allows (v7x megacore), big tiles
    #     for big batches (amortize grid-step + MXU RHS refill). ------------
    B8 = max(8, _round_up(batch, 8))
    if batch < 16:
        bm = B8
    elif batch <= 256:
        bm = _round_up(-(-B8 // 2), 8)                 # exactly 2 batch tiles
    else:
        bm = 512 if B8 >= 1024 else 256

    def tile_bytes(m):   # in/out double-buffered + state scratch + live temps
        return m * 4 * (2 * X_pad + 2 * O_w + 8 * T_pad)

    w_bytes = n_hidden * T_pad * T_pad * 2             # bf16, single-buffered
    b_bytes = n_hidden * T_pad * 4
    resident_fixed = w_bytes + b_bytes + (4 << 20)
    use_resident = (not force_streaming) and (resident_fixed + tile_bytes(8) <= cap)

    if use_resident:
        while bm > 8 and resident_fixed + tile_bytes(bm) > cap:
            bm = max(8, _round_up(bm // 2, 8))
        fixed = resident_fixed
    else:
        fixed = 2 * (T_pad * T_pad * 2 + T_pad * 4) + (4 << 20)   # 2 streamed layers
        while bm > 8 and fixed + tile_bytes(bm) > cap:
            bm = max(8, _round_up(bm // 2, 8))

    grid_b = -(-B8 // bm)
    B_pad = bm * grid_b
    vmem_limit = int(min(max(fixed + tile_bytes(bm) + (4 << 20), 16 << 20), cap))

    # Lane-dense x slab: x in cols [0, n_inputs), zeros elsewhere.  No padded
    # middle-of-state bytes move HBM<->VMEM in either direction.
    x_slab = jnp.zeros((B_pad, X_pad), jnp.float32)
    x_slab = x_slab.at[:batch, :n_inputs].set(x.astype(jnp.float32))

    if use_resident:
        kernel = functools.partial(_resident_kernel, n_inputs=n_inputs,
                                   n_hidden=n_hidden, x_pad=X_pad, out_col0=O0)
        out_full = pl.pallas_call(
            kernel,
            out_shape=jax.ShapeDtypeStruct((B_pad, O_w), jnp.float32),
            grid_spec=pltpu.PrefetchScalarGridSpec(
                num_scalar_prefetch=0,
                grid=(grid_b,),
                in_specs=[
                    pl.BlockSpec((bm, X_pad), lambda b: (b, 0)),
                    # Grid-invariant params: single buffer (no wasted 2x VMEM).
                    pl.BlockSpec((n_hidden, T_pad, T_pad), lambda b: (0, 0, 0),
                                 pipeline_mode=pl.Buffered(1)),
                    pl.BlockSpec((n_hidden, 1, T_pad), lambda b: (0, 0, 0),
                                 pipeline_mode=pl.Buffered(1)),
                ],
                out_specs=pl.BlockSpec((bm, O_w), lambda b: (b, 0)),
                scratch_shapes=[pltpu.VMEM((bm, T_pad), jnp.float32)],
            ),
            compiler_params=pltpu.CompilerParams(
                dimension_semantics=("parallel",),
                vmem_limit_bytes=vmem_limit,
            ),
        )(x_slab, w_pad, b_pad)
    else:
        kernel = functools.partial(_stream_kernel, x_pad=X_pad, out_col0=O0)
        out_full = pl.pallas_call(
            kernel,
            out_shape=jax.ShapeDtypeStruct((B_pad, O_w), jnp.float32),
            grid_spec=pltpu.PrefetchScalarGridSpec(
                num_scalar_prefetch=0,
                grid=(grid_b, n_hidden),
                in_specs=[
                    pl.BlockSpec((bm, X_pad), lambda b, i: (b, 0)),
                    # One layer per step, default double-buffer -> next-layer
                    # weight DMA overlaps the current matmul.
                    pl.BlockSpec((1, T_pad, T_pad), lambda b, i: (i, 0, 0)),
                    pl.BlockSpec((1, 1, T_pad), lambda b, i: (i, 0, 0)),
                ],
                out_specs=pl.BlockSpec((bm, O_w), lambda b, i: (b, 0)),
                scratch_shapes=[pltpu.VMEM((bm, T_pad), jnp.float32)],
            ),
            compiler_params=pltpu.CompilerParams(
                dimension_semantics=("parallel", "arbitrary"),
                vmem_limit_bytes=vmem_limit,
            ),
        )(x_slab, w_pad, b_pad)

    lo = (total - n_outputs) - O0
    return out_full[:batch, lo:lo + n_outputs]


# --------------------------------------------------------------------------
# Reference (numpy, emulating the kernel's bf16 matmul operands)
# --------------------------------------------------------------------------
def _bf16_round(a):
    return np.asarray(
        jnp.asarray(np.asarray(a, np.float32)).astype(jnp.bfloat16)
        .astype(jnp.float32))


def _reference_forward(x, weights, biases, *, n_inputs, n_outputs, n_hidden):
    batch = x.shape[0]
    total = n_inputs + n_hidden + n_outputs
    state = np.zeros((batch, total), np.float32)
    state[:, :n_inputs] = x
    for i in range(n_hidden):
        L = n_inputs + i
        w = _bf16_round(np.asarray(weights[i], np.float32))    # (out_i, in_i)
        b = np.asarray(biases[i], np.float32)
        lin = _bf16_round(state[:, :L])
        state[:, L:] += np.maximum(lin @ w.T + b, 0.0)
    return state[:, -n_outputs:]


if __name__ == "__main__":
    n_inputs, n_outputs, n_hidden = 8, 8, 10       # total_size = 26
    key = jax.random.PRNGKey(0)

    # Deterministic Linear-like init: U(-1/sqrt(in), 1/sqrt(in)).
    weights, biases = [], []
    for i in range(n_hidden):
        in_i = n_inputs + i
        out_i = n_outputs + n_hidden - i
        key, kw, kb = jax.random.split(key, 3)
        bound = 1.0 / np.sqrt(in_i)
        weights.append(np.asarray(
            jax.random.uniform(kw, (out_i, in_i), jnp.float32, -bound, bound)))
        biases.append(np.asarray(
            jax.random.uniform(kb, (out_i,), jnp.float32, -bound, bound)))

    # One-time packing (parameter-load time, out of the hot path).
    w_pad, b_pad = pack_dense_jungle_params(
        weights, biases,
        n_inputs=n_inputs, n_outputs=n_outputs, n_hidden=n_hidden)

    # Exercise: resident single-tile, resident 2-tile (megacore path), and the
    # layer-streaming fallback (forced; it is what large T_pad/n_hidden use).
    for batch, force_streaming in ((4, False), (32, False), (4, True)):
        key, kx = jax.random.split(key)
        x = jax.random.normal(kx, (batch, n_inputs), dtype=jnp.float32)
        out = dense_jungle_forward(
            x, w_pad, b_pad,
            n_inputs=n_inputs, n_outputs=n_outputs, n_hidden=n_hidden,
            force_streaming=force_streaming)
        out = jax.block_until_ready(out)
        ref = _reference_forward(
            np.asarray(x), weights, biases,
            n_inputs=n_inputs, n_outputs=n_outputs, n_hidden=n_hidden)
        np.testing.assert_allclose(np.asarray(out), ref, rtol=1e-3, atol=1e-3)

    print("KERNEL_OK")
</pallas_src>

<mosaic_0001>
module attributes {stable_mosaic.version = 11 : i64} {
  func.func @_resident_kernel(%arg0: i32, %arg1: memref<8x128xf32, #tpu.memory_space<vmem>>, %arg2: memref<10x128x128xbf16, #tpu.memory_space<vmem>>, %arg3: memref<10x1x128xf32, #tpu.memory_space<vmem>>, %arg4: memref<8x128xf32, #tpu.memory_space<vmem>>, %arg5: memref<8x128xf32, #tpu.memory_space<vmem>>) attributes {dimension_semantics = [#tpu.dimension_semantics<parallel>], iteration_bounds = array<i64: 1>, scalar_prefetch = 0 : i64, scratch_operands = 1 : i64, tpu.core_type = #tpu.core_type<tc>, window_params = [{transform_indices = @transform_0, window_bounds = array<i64: 8, 128>}, {pipeline_mode = #tpu.pipeline_mode<synchronous>, transform_indices = @transform_1, window_bounds = array<i64: 10, 128, 128>}, {pipeline_mode = #tpu.pipeline_mode<synchronous>, transform_indices = @transform_2, window_bounds = array<i64: 10, 1, 128>}, {transform_indices = @transform_3, window_bounds = array<i64: 8, 128>}]} {
    %cst = arith.constant 0.000000e+00 : f32
    %0 = vector.broadcast %cst : f32 to vector<8x128xf32>
    %c0 = arith.constant 0 : index
    %c0_0 = arith.constant 0 : index
    %1 = vector.load %arg5[%c0, %c0_0] : memref<8x128xf32, #tpu.memory_space<vmem>>, vector<8x128xf32>
    tpu.vector_store %arg5[%c0, %c0_0], %0 {strides = array<i32>} : memref<8x128xf32, #tpu.memory_space<vmem>>, vector<8x128xf32>,
    %c0_1 = arith.constant 0 : index
    %c0_2 = arith.constant 0 : index
    %2 = vector.load %arg1[%c0_1, %c0_2] : memref<8x128xf32, #tpu.memory_space<vmem>>, vector<8x128xf32>
    %c0_3 = arith.constant 0 : index
    %c0_4 = arith.constant 0 : index
    %3 = vector.load %arg5[%c0_3, %c0_4] : memref<8x128xf32, #tpu.memory_space<vmem>>, vector<8x128xf32>
    tpu.vector_store %arg5[%c0_3, %c0_4], %2 {strides = array<i32>} : memref<8x128xf32, #tpu.memory_space<vmem>>, vector<8x128xf32>,
    %c0_5 = arith.constant 0 : index
    %c0_6 = arith.constant 0 : index
    %4 = vector.load %arg5[%c0_5, %c0_6] : memref<8x128xf32, #tpu.memory_space<vmem>>, vector<8x128xf32>
    %5 = arith.truncf %4 : vector<8x128xf32> to vector<8x128xbf16>
    %c0_7 = arith.constant 0 : index
    %c0_8 = arith.constant 0 : index
    %c0_9 = arith.constant 0 : index
    %6 = vector.load %arg2[%c0_7, %c0_8, %c0_9] : memref<10x128x128xbf16, #tpu.memory_space<vmem>>, vector<1x128x128xbf16>
    %7 = vector.shape_cast %6 : vector<1x128x128xbf16> to vector<128x128xbf16>
    %cst_10 = arith.constant dense<0.000000e+00> : vector<8x128xf32>
    %8 = tpu.matmul %5, %7, %cst_10 {dimension_numbers = #tpu.dot_dimension_numbers<[1], [0], [0], [1], [0, 0, 1, 1], [], []>} : vector<8x128xbf16>, vector<128x128xbf16>, vector<8x128xf32> -> vector<8x128xf32>
    %c0_11 = arith.constant 0 : index
    %c0_12 = arith.constant 0 : index
    %c0_13 = arith.constant 0 : index
    %9 = vector.load %arg3[%c0_11, %c0_12, %c0_13] : memref<10x1x128xf32, #tpu.memory_space<vmem>>, vector<1x1x128xf32>
    %10 = vector.shape_cast %9 : vector<1x1x128xf32> to vector<1x128xf32>
    %11 = vector.broadcast %10 : vector<1x128xf32> to vector<8x128xf32>
    %12 = arith.addf %8, %11 : vector<8x128xf32>
    %c0_14 = arith.constant 0 : index
    %c0_15 = arith.constant 0 : index
    %13 = vector.load %arg5[%c0_14, %c0_15] : memref<8x128xf32, #tpu.memory_space<vmem>>, vector<8x128xf32>
    %cst_16 = arith.constant 0.000000e+00 : f32
    %14 = vector.broadcast %cst_16 : f32 to vector<8x128xf32>
    %15 = arith.maximumf %12, %14 : vector<8x128xf32>
    %16 = arith.addf %13, %15 : vector<8x128xf32>
    %c0_17 = arith.constant 0 : index
    %c0_18 = arith.constant 0 : index
    %17 = vector.load %arg5[%c0_17, %c0_18] : memref<8x128xf32, #tpu.memory_space<vmem>>, vector<8x128xf32>
    tpu.vector_store %arg5[%c0_17, %c0_18], %16 {strides = array<i32>} : memref<8x128xf32, #tpu.memory_space<vmem>>, vector<8x128xf32>,
    %c0_19 = arith.constant 0 : index
    %c0_20 = arith.constant 0 : index
    %18 = vector.load %arg5[%c0_19, %c0_20] : memref<8x128xf32, #tpu.memory_space<vmem>>, vector<8x128xf32>
    %19 = arith.truncf %18 : vector<8x128xf32> to vector<8x128xbf16>
    %c1 = arith.constant 1 : index
    %c0_21 = arith.constant 0 : index
    %c0_22 = arith.constant 0 : index
    %20 = vector.load %arg2[%c1, %c0_21, %c0_22] : memref<10x128x128xbf16, #tpu.memory_space<vmem>>, vector<1x128x128xbf16>
    %21 = vector.shape_cast %20 : vector<1x128x128xbf16> to vector<128x128xbf16>
    %cst_23 = arith.constant dense<0.000000e+00> : vector<8x128xf32>
    %22 = tpu.matmul %19, %21, %cst_23 {dimension_numbers = #tpu.dot_dimension_numbers<[1], [0], [0], [1], [0, 0, 1, 1], [], []>} : vector<8x128xbf16>, vector<128x128xbf16>, vector<8x128xf32> -> vector<8x128xf32>
    %c1_24 = arith.constant 1 : index
    %c0_25 = arith.constant 0 : index
    %c0_26 = arith.constant 0 : index
    %23 = vector.load %arg3[%c1_24, %c0_25, %c0_26] : memref<10x1x128xf32, #tpu.memory_space<vmem>>, vector<1x1x128xf32>
    %24 = vector.shape_cast %23 : vector<1x1x128xf32> to vector<1x128xf32>
    %25 = vector.broadcast %24 : vector<1x128xf32> to vector<8x128xf32>
    %26 = arith.addf %22, %25 : vector<8x128xf32>
    %c0_27 = arith.constant 0 : index
    %c0_28 = arith.constant 0 : index
    %27 = vector.load %arg5[%c0_27, %c0_28] : memref<8x128xf32, #tpu.memory_space<vmem>>, vector<8x128xf32>
    %cst_29 = arith.constant 0.000000e+00 : f32
    %28 = vector.broadcast %cst_29 : f32 to vector<8x128xf32>
    %29 = arith.maximumf %26, %28 : vector<8x128xf32>
    %30 = arith.addf %27, %29 : vector<8x128xf32>
    %c0_30 = arith.constant 0 : index
    %c0_31 = arith.constant 0 : index
    %31 = vector.load %arg5[%c0_30, %c0_31] : memref<8x128xf32, #tpu.memory_space<vmem>>, vector<8x128xf32>
    tpu.vector_store %arg5[%c0_30, %c0_31], %30 {strides = array<i32>} : memref<8x128xf32, #tpu.memory_space<vmem>>, vector<8x128xf32>,
    %c0_32 = arith.constant 0 : index
    %c0_33 = arith.constant 0 : index
    %32 = vector.load %arg5[%c0_32, %c0_33] : memref<8x128xf32, #tpu.memory_space<vmem>>, vector<8x128xf32>
    %33 = arith.truncf %32 : vector<8x128xf32> to vector<8x128xbf16>
    %c2 = arith.constant 2 : index
    %c0_34 = arith.constant 0 : index
    %c0_35 = arith.constant 0 : index
    %34 = vector.load %arg2[%c2, %c0_34, %c0_35] : memref<10x128x128xbf16, #tpu.memory_space<vmem>>, vector<1x128x128xbf16>
    %35 = vector.shape_cast %34 : vector<1x128x128xbf16> to vector<128x128xbf16>
    %cst_36 = arith.constant dense<0.000000e+00> : vector<8x128xf32>
    %36 = tpu.matmul %33, %35, %cst_36 {dimension_numbers = #tpu.dot_dimension_numbers<[1], [0], [0], [1], [0, 0, 1, 1], [], []>} : vector<8x128xbf16>, vector<128x128xbf16>, vector<8x128xf32> -> vector<8x128xf32>
    %c2_37 = arith.constant 2 : index
    %c0_38 = arith.constant 0 : index
    %c0_39 = arith.constant 0 : index
    %37 = vector.load %arg3[%c2_37, %c0_38, %c0_39] : memref<10x1x128xf32, #tpu.memory_space<vmem>>, vector<1x1x128xf32>
    %38 = vector.shape_cast %37 : vector<1x1x128xf32> to vector<1x128xf32>
    %39 = vector.broadcast %38 : vector<1x128xf32> to vector<8x128xf32>
    %40 = arith.addf %36, %39 : vector<8x128xf32>
    %c0_40 = arith.constant 0 : index
    %c0_41 = arith.constant 0 : index
    %41 = vector.load %arg5[%c0_40, %c0_41] : memref<8x128xf32, #tpu.memory_space<vmem>>, vector<8x128xf32>
    %cst_42 = arith.constant 0.000000e+00 : f32
    %42 = vector.broadcast %cst_42 : f32 to vector<8x128xf32>
    %43 = arith.maximumf %40, %42 : vector<8x128xf32>
    %44 = arith.addf %41, %43 : vector<8x128xf32>
    %c0_43 = arith.constant 0 : index
    %c0_44 = arith.constant 0 : index
    %45 = vector.load %arg5[%c0_43, %c0_44] : memref<8x128xf32, #tpu.memory_space<vmem>>, vector<8x128xf32>
    tpu.vector_store %arg5[%c0_43, %c0_44], %44 {strides = array<i32>} : memref<8x128xf32, #tpu.memory_space<vmem>>, vector<8x128xf32>,
    %c0_45 = arith.constant 0 : index
    %c0_46 = arith.constant 0 : index
    %46 = vector.load %arg5[%c0_45, %c0_46] : memref<8x128xf32, #tpu.memory_space<vmem>>, vector<8x128xf32>
    %47 = arith.truncf %46 : vector<8x128xf32> to vector<8x128xbf16>
    %c3 = arith.constant 3 : index
    %c0_47 = arith.constant 0 : index
    %c0_48 = arith.constant 0 : index
    %48 = vector.load %arg2[%c3, %c0_47, %c0_48] : memref<10x128x128xbf16, #tpu.memory_space<vmem>>, vector<1x128x128xbf16>
    %49 = vector.shape_cast %48 : vector<1x128x128xbf16> to vector<128x128xbf16>
    %cst_49 = arith.constant dense<0.000000e+00> : vector<8x128xf32>
    %50 = tpu.matmul %47, %49, %cst_49 {dimension_numbers = #tpu.dot_dimension_numbers<[1], [0], [0], [1], [0, 0, 1, 1], [], []>} : vector<8x128xbf16>, vector<128x128xbf16>, vector<8x128xf32> -> vector<8x128xf32>
    %c3_50 = arith.constant 3 : index
    %c0_51 = arith.constant 0 : index
    %c0_52 = arith.constant 0 : index
    %51 = vector.load %arg3[%c3_50, %c0_51, %c0_52] : memref<10x1x128xf32, #tpu.memory_space<vmem>>, vector<1x1x128xf32>
    %52 = vector.shape_cast %51 : vector<1x1x128xf32> to vector<1x128xf32>
    %53 = vector.broadcast %52 : vector<1x128xf32> to vector<8x128xf32>
    %54 = arith.addf %50, %53 : vector<8x128xf32>
    %c0_53 = arith.constant 0 : index
    %c0_54 = arith.constant 0 : index
    %55 = vector.load %arg5[%c0_53, %c0_54] : memref<8x128xf32, #tpu.memory_space<vmem>>, vector<8x128xf32>
    %cst_55 = arith.constant 0.000000e+00 : f32
    %56 = vector.broadcast %cst_55 : f32 to vector<8x128xf32>
    %57 = arith.maximumf %54, %56 : vector<8x128xf32>
    %58 = arith.addf %55, %57 : vector<8x128xf32>
    %c0_56 = arith.constant 0 : index
    %c0_57 = arith.constant 0 : index
    %59 = vector.load %arg5[%c0_56, %c0_57] : memref<8x128xf32, #tpu.memory_space<vmem>>, vector<8x128xf32>
    tpu.vector_store %arg5[%c0_56, %c0_57], %58 {strides = array<i32>} : memref<8x128xf32, #tpu.memory_space<vmem>>, vector<8x128xf32>,
    %c0_58 = arith.constant 0 : index
    %c0_59 = arith.constant 0 : index
    %60 = vector.load %arg5[%c0_58, %c0_59] : memref<8x128xf32, #tpu.memory_space<vmem>>, vector<8x128xf32>
    %61 = arith.truncf %60 : vector<8x128xf32> to vector<8x128xbf16>
    %c4 = arith.constant 4 : index
    %c0_60 = arith.constant 0 : index
    %c0_61 = arith.constant 0 : index
    %62 = vector.load %arg2[%c4, %c0_60, %c0_61] : memref<10x128x128xbf16, #tpu.memory_space<vmem>>, vector<1x128x128xbf16>
    %63 = vector.shape_cast %62 : vector<1x128x128xbf16> to vector<128x128xbf16>
    %cst_62 = arith.constant dense<0.000000e+00> : vector<8x128xf32>
    %64 = tpu.matmul %61, %63, %cst_62 {dimension_numbers = #tpu.dot_dimension_numbers<[1], [0], [0], [1], [0, 0, 1, 1], [], []>} : vector<8x128xbf16>, vector<128x128xbf16>, vector<8x128xf32> -> vector<8x128xf32>
    %c4_63 = arith.constant 4 : index
    %c0_64 = arith.constant 0 : index
    %c0_65 = arith.constant 0 : index
    %65 = vector.load %arg3[%c4_63, %c0_64, %c0_65] : memref<10x1x128xf32, #tpu.memory_space<vmem>>, vector<1x1x128xf32>
    %66 = vector.shape_cast %65 : vector<1x1x128xf32> to vector<1x128xf32>
    %67 = vector.broadcast %66 : vector<1x128xf32> to vector<8x128xf32>
    %68 = arith.addf %64, %67 : vector<8x128xf32>
    %c0_66 = arith.constant 0 : index
    %c0_67 = arith.constant 0 : index
    %69 = vector.load %arg5[%c0_66, %c0_67] : memref<8x128xf32, #tpu.memory_space<vmem>>, vector<8x128xf32>
    %cst_68 = arith.constant 0.000000e+00 : f32
    %70 = vector.broadcast %cst_68 : f32 to vector<8x128xf32>
    %71 = arith.maximumf %68, %70 : vector<8x128xf32>
    %72 = arith.addf %69, %71 : vector<8x128xf32>
    %c0_69 = arith.constant 0 : index
    %c0_70 = arith.constant 0 : index
    %73 = vector.load %arg5[%c0_69, %c0_70] : memref<8x128xf32, #tpu.memory_space<vmem>>, vector<8x128xf32>
    tpu.vector_store %arg5[%c0_69, %c0_70], %72 {strides = array<i32>} : memref<8x128xf32, #tpu.memory_space<vmem>>, vector<8x128xf32>,
    %c0_71 = arith.constant 0 : index
    %c0_72 = arith.constant 0 : index
    %74 = vector.load %arg5[%c0_71, %c0_72] : memref<8x128xf32, #tpu.memory_space<vmem>>, vector<8x128xf32>
    %75 = arith.truncf %74 : vector<8x128xf32> to vector<8x128xbf16>
    %c5 = arith.constant 5 : index
    %c0_73 = arith.constant 0 : index
    %c0_74 = arith.constant 0 : index
    %76 = vector.load %arg2[%c5, %c0_73, %c0_74] : memref<10x128x128xbf16, #tpu.memory_space<vmem>>, vector<1x128x128xbf16>
    %77 = vector.shape_cast %76 : vector<1x128x128xbf16> to vector<128x128xbf16>
    %cst_75 = arith.constant dense<0.000000e+00> : vector<8x128xf32>
    %78 = tpu.matmul %75, %77, %cst_75 {dimension_numbers = #tpu.dot_dimension_numbers<[1], [0], [0], [1], [0, 0, 1, 1], [], []>} : vector<8x128xbf16>, vector<128x128xbf16>, vector<8x128xf32> -> vector<8x128xf32>
    %c5_76 = arith.constant 5 : index
    %c0_77 = arith.constant 0 : index
    %c0_78 = arith.constant 0 : index
    %79 = vector.load %arg3[%c5_76, %c0_77, %c0_78] : memref<10x1x128xf32, #tpu.memory_space<vmem>>, vector<1x1x128xf32>
    %80 = vector.shape_cast %79 : vector<1x1x128xf32> to vector<1x128xf32>
    %81 = vector.broadcast %80 : vector<1x128xf32> to vector<8x128xf32>
    %82 = arith.addf %78, %81 : vector<8x128xf32>
    %c0_79 = arith.constant 0 : index
    %c0_80 = arith.constant 0 : index
    %83 = vector.load %arg5[%c0_79, %c0_80] : memref<8x128xf32, #tpu.memory_space<vmem>>, vector<8x128xf32>
    %cst_81 = arith.constant 0.000000e+00 : f32
    %84 = vector.broadcast %cst_81 : f32 to vector<8x128xf32>
    %85 = arith.maximumf %82, %84 : vector<8x128xf32>
    %86 = arith.addf %83, %85 : vector<8x128xf32>
    %c0_82 = arith.constant 0 : index
    %c0_83 = arith.constant 0 : index
    %87 = vector.load %arg5[%c0_82, %c0_83] : memref<8x128xf32, #tpu.memory_space<vmem>>, vector<8x128xf32>
    tpu.vector_store %arg5[%c0_82, %c0_83], %86 {strides = array<i32>} : memref<8x128xf32, #tpu.memory_space<vmem>>, vector<8x128xf32>,
    %c0_84 = arith.constant 0 : index
    %c0_85 = arith.constant 0 : index
    %88 = vector.load %arg5[%c0_84, %c0_85] : memref<8x128xf32, #tpu.memory_space<vmem>>, vector<8x128xf32>
    %89 = arith.truncf %88 : vector<8x128xf32> to vector<8x128xbf16>
    %c6 = arith.constant 6 : index
    %c0_86 = arith.constant 0 : index
    %c0_87 = arith.constant 0 : index
    %90 = vector.load %arg2[%c6, %c0_86, %c0_87] : memref<10x128x128xbf16, #tpu.memory_space<vmem>>, vector<1x128x128xbf16>
    %91 = vector.shape_cast %90 : vector<1x128x128xbf16> to vector<128x128xbf16>
    %cst_88 = arith.constant dense<0.000000e+00> : vector<8x128xf32>
    %92 = tpu.matmul %89, %91, %cst_88 {dimension_numbers = #tpu.dot_dimension_numbers<[1], [0], [0], [1], [0, 0, 1, 1], [], []>} : vector<8x128xbf16>, vector<128x128xbf16>, vector<8x128xf32> -> vector<8x128xf32>
    %c6_89 = arith.constant 6 : index
    %c0_90 = arith.constant 0 : index
    %c0_91 = arith.constant 0 : index
    %93 = vector.load %arg3[%c6_89, %c0_90, %c0_91] : memref<10x1x128xf32, #tpu.memory_space<vmem>>, vector<1x1x128xf32>
    %94 = vector.shape_cast %93 : vector<1x1x128xf32> to vector<1x128xf32>
    %95 = vector.broadcast %94 : vector<1x128xf32> to vector<8x128xf32>
    %96 = arith.addf %92, %95 : vector<8x128xf32>
    %c0_92 = arith.constant 0 : index
    %c0_93 = arith.constant 0 : index
    %97 = vector.load %arg5[%c0_92, %c0_93] : memref<8x128xf32, #tpu.memory_space<vmem>>, vector<8x128xf32>
    %cst_94 = arith.constant 0.000000e+00 : f32
    %98 = vector.broadcast %cst_94 : f32 to vector<8x128xf32>
    %99 = arith.maximumf %96, %98 : vector<8x128xf32>
    %100 = arith.addf %97, %99 : vector<8x128xf32>
    %c0_95 = arith.constant 0 : index
    %c0_96 = arith.constant 0 : index
    %101 = vector.load %arg5[%c0_95, %c0_96] : memref<8x128xf32, #tpu.memory_space<vmem>>, vector<8x128xf32>
    tpu.vector_store %arg5[%c0_95, %c0_96], %100 {strides = array<i32>} : memref<8x128xf32, #tpu.memory_space<vmem>>, vector<8x128xf32>,
    %c0_97 = arith.constant 0 : index
    %c0_98 = arith.constant 0 : index
    %102 = vector.load %arg5[%c0_97, %c0_98] : memref<8x128xf32, #tpu.memory_space<vmem>>, vector<8x128xf32>
    %103 = arith.truncf %102 : vector<8x128xf32> to vector<8x128xbf16>
    %c7 = arith.constant 7 : index
    %c0_99 = arith.constant 0 : index
    %c0_100 = arith.constant 0 : index
    %104 = vector.load %arg2[%c7, %c0_99, %c0_100] : memref<10x128x128xbf16, #tpu.memory_space<vmem>>, vector<1x128x128xbf16>
    %105 = vector.shape_cast %104 : vector<1x128x128xbf16> to vector<128x128xbf16>
    %cst_101 = arith.constant dense<0.000000e+00> : vector<8x128xf32>
    %106 = tpu.matmul %103, %105, %cst_101 {dimension_numbers = #tpu.dot_dimension_numbers<[1], [0], [0], [1], [0, 0, 1, 1], [], []>} : vector<8x128xbf16>, vector<128x128xbf16>, vector<8x128xf32> -> vector<8x128xf32>
    %c7_102 = arith.constant 7 : index
    %c0_103 = arith.constant 0 : index
    %c0_104 = arith.constant 0 : index
    %107 = vector.load %arg3[%c7_102, %c0_103, %c0_104] : memref<10x1x128xf32, #tpu.memory_space<vmem>>, vector<1x1x128xf32>
    %108 = vector.shape_cast %107 : vector<1x1x128xf32> to vector<1x128xf32>
    %109 = vector.broadcast %108 : vector<1x128xf32> to vector<8x128xf32>
    %110 = arith.addf %106, %109 : vector<8x128xf32>
    %c0_105 = arith.constant 0 : index
    %c0_106 = arith.constant 0 : index
    %111 = vector.load %arg5[%c0_105, %c0_106] : memref<8x128xf32, #tpu.memory_space<vmem>>, vector<8x128xf32>
    %cst_107 = arith.constant 0.000000e+00 : f32
    %112 = vector.broadcast %cst_107 : f32 to vector<8x128xf32>
    %113 = arith.maximumf %110, %112 : vector<8x128xf32>
    %114 = arith.addf %111, %113 : vector<8x128xf32>
    %c0_108 = arith.constant 0 : index
    %c0_109 = arith.constant 0 : index
    %115 = vector.load %arg5[%c0_108, %c0_109] : memref<8x128xf32, #tpu.memory_space<vmem>>, vector<8x128xf32>
    tpu.vector_store %arg5[%c0_108, %c0_109], %114 {strides = array<i32>} : memref<8x128xf32, #tpu.memory_space<vmem>>, vector<8x128xf32>,
    %c0_110 = arith.constant 0 : index
    %c0_111 = arith.constant 0 : index
    %116 = vector.load %arg5[%c0_110, %c0_111] : memref<8x128xf32, #tpu.memory_space<vmem>>, vector<8x128xf32>
    %117 = arith.truncf %116 : vector<8x128xf32> to vector<8x128xbf16>
    %c8 = arith.constant 8 : index
    %c0_112 = arith.constant 0 : index
    %c0_113 = arith.constant 0 : index
    %118 = vector.load %arg2[%c8, %c0_112, %c0_113] : memref<10x128x128xbf16, #tpu.memory_space<vmem>>, vector<1x128x128xbf16>
    %119 = vector.shape_cast %118 : vector<1x128x128xbf16> to vector<128x128xbf16>
    %cst_114 = arith.constant dense<0.000000e+00> : vector<8x128xf32>
    %120 = tpu.matmul %117, %119, %cst_114 {dimension_numbers = #tpu.dot_dimension_numbers<[1], [0], [0], [1], [0, 0, 1, 1], [], []>} : vector<8x128xbf16>, vector<128x128xbf16>, vector<8x128xf32> -> vector<8x128xf32>
    %c8_115 = arith.constant 8 : index
    %c0_116 = arith.constant 0 : index
    %c0_117 = arith.constant 0 : index
    %121 = vector.load %arg3[%c8_115, %c0_116, %c0_117] : memref<10x1x128xf32, #tpu.memory_space<vmem>>, vector<1x1x128xf32>
    %122 = vector.shape_cast %121 : vector<1x1x128xf32> to vector<1x128xf32>
    %123 = vector.broadcast %122 : vector<1x128xf32> to vector<8x128xf32>
    %124 = arith.addf %120, %123 : vector<8x128xf32>
    %c0_118 = arith.constant 0 : index
    %c0_119 = arith.constant 0 : index
    %125 = vector.load %arg5[%c0_118, %c0_119] : memref<8x128xf32, #tpu.memory_space<vmem>>, vector<8x128xf32>
    %cst_120 = arith.constant 0.000000e+00 : f32
    %126 = vector.broadcast %cst_120 : f32 to vector<8x128xf32>
    %127 = arith.maximumf %124, %126 : vector<8x128xf32>
    %128 = arith.addf %125, %127 : vector<8x128xf32>
    %c0_121 = arith.constant 0 : index
    %c0_122 = arith.constant 0 : index
    %129 = vector.load %arg5[%c0_121, %c0_122] : memref<8x128xf32, #tpu.memory_space<vmem>>, vector<8x128xf32>
    tpu.vector_store %arg5[%c0_121, %c0_122], %128 {strides = array<i32>} : memref<8x128xf32, #tpu.memory_space<vmem>>, vector<8x128xf32>,
    %c0_123 = arith.constant 0 : index
    %c0_124 = arith.constant 0 : index
    %130 = vector.load %arg5[%c0_123, %c0_124] : memref<8x128xf32, #tpu.memory_space<vmem>>, vector<8x128xf32>
    %131 = arith.truncf %130 : vector<8x128xf32> to vector<8x128xbf16>
    %c9 = arith.constant 9 : index
    %c0_125 = arith.constant 0 : index
    %c0_126 = arith.constant 0 : index
    %132 = vector.load %arg2[%c9, %c0_125, %c0_126] : memref<10x128x128xbf16, #tpu.memory_space<vmem>>, vector<1x128x128xbf16>
    %133 = vector.shape_cast %132 : vector<1x128x128xbf16> to vector<128x128xbf16>
    %cst_127 = arith.constant dense<0.000000e+00> : vector<8x128xf32>
    %134 = tpu.matmul %131, %133, %cst_127 {dimension_numbers = #tpu.dot_dimension_numbers<[1], [0], [0], [1], [0, 0, 1, 1], [], []>} : vector<8x128xbf16>, vector<128x128xbf16>, vector<8x128xf32> -> vector<8x128xf32>
    %c9_128 = arith.constant 9 : index
    %c0_129 = arith.constant 0 : index
    %c0_130 = arith.constant 0 : index
    %135 = vector.load %arg3[%c9_128, %c0_129, %c0_130] : memref<10x1x128xf32, #tpu.memory_space<vmem>>, vector<1x1x128xf32>
    %136 = vector.shape_cast %135 : vector<1x1x128xf32> to vector<1x128xf32>
    %137 = vector.broadcast %136 : vector<1x128xf32> to vector<8x128xf32>
    %138 = arith.addf %134, %137 : vector<8x128xf32>
    %c0_131 = arith.constant 0 : index
    %c0_132 = arith.constant 0 : index
    %139 = vector.load %arg5[%c0_131, %c0_132] : memref<8x128xf32, #tpu.memory_space<vmem>>, vector<8x128xf32>
    %cst_133 = arith.constant 0.000000e+00 : f32
    %140 = vector.broadcast %cst_133 : f32 to vector<8x128xf32>
    %141 = arith.maximumf %138, %140 : vector<8x128xf32>
    %142 = arith.addf %139, %141 : vector<8x128xf32>
    %c0_134 = arith.constant 0 : index
    %c0_135 = arith.constant 0 : index
    %143 = vector.load %arg5[%c0_134, %c0_135] : memref<8x128xf32, #tpu.memory_space<vmem>>, vector<8x128xf32>
    tpu.vector_store %arg5[%c0_134, %c0_135], %142 {strides = array<i32>} : memref<8x128xf32, #tpu.memory_space<vmem>>, vector<8x128xf32>,
    %c0_136 = arith.constant 0 : index
    %c0_137 = arith.constant 0 : index
    %144 = vector.load %arg5[%c0_136, %c0_137] : memref<8x128xf32, #tpu.memory_space<vmem>>, vector<8x128xf32>
    %c0_138 = arith.constant 0 : index
    %c0_139 = arith.constant 0 : index
    %145 = vector.load %arg4[%c0_138, %c0_139] : memref<8x128xf32, #tpu.memory_space<vmem>>, vector<8x128xf32>
    tpu.vector_store %arg4[%c0_138, %c0_139], %144 {strides = array<i32>} : memref<8x128xf32, #tpu.memory_space<vmem>>, vector<8x128xf32>,
    return
  }
  func.func @transform_0(%arg0: i32) -> (i32, i32) {
    %c0_i32 = arith.constant 0 : i32
    %c0_i32_0 = arith.constant 0 : i32
    return %arg0, %c0_i32 : i32, i32
  }
  func.func @transform_1(%arg0: i32) -> (i32, i32, i32) {
    %c0_i32 = arith.constant 0 : i32
    %c0_i32_0 = arith.constant 0 : i32
    %c0_i32_1 = arith.constant 0 : i32
    %c0_i32_2 = arith.constant 0 : i32
    return %c0_i32, %c0_i32_0, %c0_i32_1 : i32, i32, i32
  }
  func.func @transform_2(%arg0: i32) -> (i32, i32, i32) {
    %c0_i32 = arith.constant 0 : i32
    %c0_i32_0 = arith.constant 0 : i32
    %c0_i32_1 = arith.constant 0 : i32
    %c0_i32_2 = arith.constant 0 : i32
    return %c0_i32, %c0_i32_0, %c0_i32_1 : i32, i32, i32
  }
  func.func @transform_3(%arg0: i32) -> (i32, i32) {
    %c0_i32 = arith.constant 0 : i32
    %c0_i32_0 = arith.constant 0 : i32
    return %arg0, %c0_i32 : i32, i32
  }
}

</mosaic_0001>

<llo_original>
// kernel: dense_jungle_forward.1
$region0: #{dense_jungle_forward.1}
  #allocation0 [shape = 'u32[]', space=smem, size = 0x4, offset = 0x4, fixed_abs, tag = 'smem constant byte address 0x4 - core index']
  #allocation1 [shape = 'u32[144,128]{1,0:T(1,128)}', space=vmem, size = 0x12000, scoped, tag = 'internal scratch']
  #allocation2 [shape = 'f32[8,128]{1,0:T(8,128)}', space=vmem, size = 0x1000, scoped, tag = 'scratch operand']
  %s0 = inlined_call_operand.vmem [shape: f32[8,128], index: 0, kind: input, shape index: {}]
  %s1 = inlined_call_operand.hbm [shape: bf16[10,128,128], index: 1, kind: input, shape index: {}]
  %s2 = inlined_call_operand.vmem [shape: f32[10,1,128], index: 2, kind: input, shape index: {}]
  %s3 = inlined_call_operand.vmem [shape: f32[8,128], index: 3, kind: output, shape index: {}]
  %s4 = sld [smem:[#allocation0]]
  $region26: #{dense_jungle_forward.1} parent=0
    _
  %s6 = ssub.s32 1, %s4
  %s7 = scalar_select 0, %s6, %s4
  $region1: #{dense_jungle_forward.1} parent=0
    #allocation3 [shape = 'u8[327680]{0}', space=vmem, size = 0x50000, scoped, tag = 'input window, operand 1, single buffered']
    #allocation4 [shape = 's32[1]{0}', space=sflag, size = 0x4, scoped, tag = 'scoped memory for dense_jungle_forward.1']
    %8 = vsyncpa [#allocation4], 0
    // Predicated region
    $region2: #{dense_jungle_forward.1} parent=1 // pred_check
      _
    $region3: #{dense_jungle_forward.1} parent=1 // pred_check_branch
      %10 = sbr.rel (0) target = $region5
    $region4: #{dense_jungle_forward.1} parent=1 // pred_region
      _
    $region5: #{dense_jungle_forward.1} parent=1 // pred_fallthru
      _
    // Predicated region
    $region6: #{dense_jungle_forward.1} parent=1 // pred_check
      _
    $region7: #{dense_jungle_forward.1} parent=1 // pred_check_branch
      %12 = sbr.rel (0) target = $region9
    $region8: #{dense_jungle_forward.1} parent=1 // pred_region
      %s14 = ssub.s32 10240, 10240
      %15 = vsyncadd [#allocation4], %s14
      %s16 = sshll.u32 [#allocation3], 4
      %s17 = int_to_ptr.vmem [resolvable:$true] %s16
      %22 = dma.hbm_to_vmem [thread:$0]  %s1, 10240, %s17, [#allocation4], 64, 64, 4
    $region9: #{dense_jungle_forward.1} parent=1 // pred_fallthru
      _
    // Predicated region
    $region10: #{dense_jungle_forward.1} parent=1 // pred_check
      _
    $region11: #{dense_jungle_forward.1} parent=1 // pred_check_branch
      %24 = sbr.rel (0) target = $region13
    $region12: #{dense_jungle_forward.1} parent=1 // pred_region
      _
    $region13: #{dense_jungle_forward.1} parent=1 // pred_fallthru
      _
    // Predicated region
    $region14: #{dense_jungle_forward.1} parent=1 // pred_check
      _
    $region15: #{dense_jungle_forward.1} parent=1 // pred_check_branch
      %26 = sbr.rel (0) target = $region17
    $region16: #{dense_jungle_forward.1} parent=1 // pred_region
      %27 = dma.done [#allocation4], 10240
    $region17: #{dense_jungle_forward.1} parent=1 // pred_fallthru
      _
    %29 = vst [vmem:[#allocation2] sm:$0xff] 0.0
    %v30 = vld [vmem:[%s0] sm:$0xff]
    %31 = vst [vmem:[#allocation2] sm:$0xff] %v30
    %v32 = vld [vmem:[#allocation2] sm:$0xff]
    %v33 = vpack.c.bf16 %v32, %v32
    %v34 = vld [vmem:[#allocation3] sm:$0xf]
    %v35 = vld [vmem:[#allocation3 + $0x4] sm:$0xf]
    %v36 = vld [vmem:[#allocation3 + $0x8] sm:$0xf]
    %v37 = vld [vmem:[#allocation3 + $0xc] sm:$0xf]
    %v38 = vld [vmem:[#allocation3 + $0x10] sm:$0xf]
    %v39 = vld [vmem:[#allocation3 + $0x14] sm:$0xf]
    %v40 = vld [vmem:[#allocation3 + $0x18] sm:$0xf]
    %v41 = vld [vmem:[#allocation3 + $0x1c] sm:$0xf]
    %v42 = vld [vmem:[#allocation3 + $0x20] sm:$0xf]
    %v43 = vld [vmem:[#allocation3 + $0x24] sm:$0xf]
    %v44 = vld [vmem:[#allocation3 + $0x28] sm:$0xf]
    %v45 = vld [vmem:[#allocation3 + $0x2c] sm:$0xf]
    %v46 = vld [vmem:[#allocation3 + $0x30] sm:$0xf]
    %v47 = vld [vmem:[#allocation3 + $0x34] sm:$0xf]
    %v48 = vld [vmem:[#allocation3 + $0x38] sm:$0xf]
    %v49 = vld [vmem:[#allocation3 + $0x3c] sm:$0xf]
    %v50 = vld [vmem:[%s2] sm:$0x1]
    %v52 = vlaneseq
    %v53 = vshrl.u32 %v52, 7
    %v54 = vsub.s32 0, %v53
    %v55 = vrot.slane %v50, %v54
    %v73 = vunpack.c.l.b16 %v34
    %v74 = vunpack.c.l.b16 %v35
    %v75 = vunpack.c.l.b16 %v36
    %v76 = vunpack.c.l.b16 %v37
    %v77 = vunpack.c.l.b16 %v38
    %v78 = vunpack.c.l.b16 %v39
    %v79 = vunpack.c.l.b16 %v40
    %v80 = vunpack.c.l.b16 %v41
    %v81 = vunpack.c.l.b16 %v42
    %v82 = vunpack.c.l.b16 %v43
    %v83 = vunpack.c.l.b16 %v44
    %v84 = vunpack.c.l.b16 %v45
    %v85 = vunpack.c.l.b16 %v46
    %v86 = vunpack.c.l.b16 %v47
    %v87 = vunpack.c.l.b16 %v48
    %v88 = vunpack.c.l.b16 %v49
    %v89 = vpack.c.b16 %v74, %v73
    %v90 = vpack.c.b16 %v76, %v75
    %v91 = vpack.c.b16 %v78, %v77
    %v92 = vpack.c.b16 %v80, %v79
    %v93 = vpack.c.b16 %v82, %v81
    %v94 = vpack.c.b16 %v84, %v83
    %v95 = vpack.c.b16 %v86, %v85
    %v96 = vpack.c.b16 %v88, %v87
    %105 = vmatprep.subr.bf16.mxu0 0
    %106 = vmatpush1.bf16.msra.mxu0 %v89
    %107 = vmatprep.subr.bf16.mxu0 0
    %108 = vmatpush1.bf16.msra.mxu0 %v90
    %109 = vmatprep.subr.bf16.mxu0 0
    %110 = vmatpush1.bf16.msra.mxu0 %v91
    %111 = vmatprep.subr.bf16.mxu0 0
    %112 = vmatpush1.bf16.msra.mxu0 %v92
    %113 = vmatprep.subr.bf16.mxu0 0
    %114 = vmatpush1.bf16.msra.mxu0 %v93
    %115 = vmatprep.subr.bf16.mxu0 0
    %116 = vmatpush1.bf16.msra.mxu0 %v94
    %117 = vmatprep.subr.bf16.mxu0 0
    %118 = vmatpush1.bf16.msra.mxu0 %v95
    %119 = vmatprep.subr.bf16.mxu0 0
    %120 = vmatpush1.bf16.msra.mxu0 %v96
    %121 = vmatprep.subr.bf16.mxu0 0
    %122 = vmatpush1.bf16.msra.mxu0 0
    %123 = vmatprep.subr.bf16.mxu0 0
    %124 = vmatpush1.bf16.msra.mxu0 0
    %125 = vmatprep.subr.bf16.mxu0 0
    %126 = vmatpush1.bf16.msra.mxu0 0
    %127 = vmatprep.subr.bf16.mxu0 0
    %128 = vmatpush1.bf16.msra.mxu0 0
    %129 = vmatprep.subr.bf16.mxu0 0
    %130 = vmatpush1.bf16.msra.mxu0 0
    %131 = vmatprep.subr.bf16.mxu0 0
    %132 = vmatpush1.bf16.msra.mxu0 0
    %133 = vmatprep.subr.bf16.mxu0 0
    %134 = vmatpush1.bf16.msra.mxu0 0
    %135 = vmatprep.subr.bf16.mxu0 0
    %136 = vmatpush1.bf16.msra.mxu0 0
    %137 = vmatprep.mubr.bf16.mxu0 0
    %138 = vmatmul.mubr.bf16.gmra.mrb[0].mxu0 %v33
    %v139 = vpop.f32.mrb[0].mxu0
    %v140 = vadd.f32 %v55, %v139
    %v141 = vpop.f32.mrb[0].mxu0
    %v142 = vpop.f32.mrb[0].mxu0
    %v143 = vpop.f32.mrb[0].mxu0
    %144 = vdwg.mxu0
    %v145 = vmax.f32 %v140, 0.0
    %v146 = vadd.f32 %v32, %v145
    %147 = vst [vmem:[#allocation2] sm:$0xff] %v146
    %v148 = vld [vmem:[#allocation2] sm:$0xff]
    %v149 = vpack.c.bf16 %v148, %v148
    %s150 = scalar_lea.vmem [#allocation3], 64
    %v151 = vld [vmem:[%s150] sm:$0xf]
    %v152 = vld [vmem:[%s150 + $0x4] sm:$0xf]
    %v153 = vld [vmem:[%s150 + $0x8] sm:$0xf]
    %v154 = vld [vmem:[%s150 + $0xc] sm:$0xf]
    %v155 = vld [vmem:[%s150 + $0x10] sm:$0xf]
    %v156 = vld [vmem:[%s150 + $0x14] sm:$0xf]
    %v157 = vld [vmem:[%s150 + $0x18] sm:$0xf]
    %v158 = vld [vmem:[%s150 + $0x1c] sm:$0xf]
    %v159 = vld [vmem:[%s150 + $0x20] sm:$0xf]
    %v160 = vld [vmem:[%s150 + $0x24] sm:$0xf]
    %v161 = vld [vmem:[%s150 + $0x28] sm:$0xf]
    %v162 = vld [vmem:[%s150 + $0x2c] sm:$0xf]
    %v163 = vld [vmem:[%s150 + $0x30] sm:$0xf]
    %v164 = vld [vmem:[%s150 + $0x34] sm:$0xf]
    %v165 = vld [vmem:[%s150 + $0x38] sm:$0xf]
    %v166 = vld [vmem:[%s150 + $0x3c] sm:$0xf]
    %s167 = scalar_lea.vmem %s2, 1
    %v168 = vld [vmem:[%s167] sm:$0x1]
    %v170 = vlaneseq
    %v171 = vshrl.u32 %v170, 7
    %v172 = vsub.s32 0, %v171
    %v173 = vrot.slane %v168, %v172
    %v191 = vunpack.c.l.b16 %v151
    %v192 = vunpack.c.l.b16 %v152
    %v193 = vunpack.c.l.b16 %v153
    %v194 = vunpack.c.l.b16 %v154
    %v195 = vunpack.c.l.b16 %v155
    %v196 = vunpack.c.l.b16 %v156
    %v197 = vunpack.c.l.b16 %v157
    %v198 = vunpack.c.l.b16 %v158
    %v199 = vunpack.c.l.b16 %v159
    %v200 = vunpack.c.l.b16 %v160
    %v201 = vunpack.c.l.b16 %v161
    %v202 = vunpack.c.l.b16 %v162
    %v203 = vunpack.c.l.b16 %v163
    %v204 = vunpack.c.l.b16 %v164
    %v205 = vunpack.c.l.b16 %v165
    %v206 = vunpack.c.l.b16 %v166
    %v207 = vpack.c.b16 %v192, %v191
    %v208 = vpack.c.b16 %v194, %v193
    %v209 = vpack.c.b16 %v196, %v195
    %v210 = vpack.c.b16 %v198, %v197
    %v211 = vpack.c.b16 %v200, %v199
    %v212 = vpack.c.b16 %v202, %v201
    %v213 = vpack.c.b16 %v204, %v203
    %v214 = vpack.c.b16 %v206, %v205
    %223 = vmatprep.subr.bf16.mxu0 0
    %224 = vmatpush1.bf16.msra.mxu0 %v207
    %225 = vmatprep.subr.bf16.mxu0 0
    %226 = vmatpush1.bf16.msra.mxu0 %v208
    %227 = vmatprep.subr.bf16.mxu0 0
    %228 = vmatpush1.bf16.msra.mxu0 %v209
    %229 = vmatprep.subr.bf16.mxu0 0
    %230 = vmatpush1.bf16.msra.mxu0 %v210
    %231 = vmatprep.subr.bf16.mxu0 0
    %232 = vmatpush1.bf16.msra.mxu0 %v211
    %233 = vmatprep.subr.bf16.mxu0 0
    %234 = vmatpush1.bf16.msra.mxu0 %v212
    %235 = vmatprep.subr.bf16.mxu0 0
    %236 = vmatpush1.bf16.msra.mxu0 %v213
    %237 = vmatprep.subr.bf16.mxu0 0
    %238 = vmatpush1.bf16.msra.mxu0 %v214
    %239 = vmatprep.subr.bf16.mxu0 0
    %240 = vmatpush1.bf16.msra.mxu0 0
    %241 = vmatprep.subr.bf16.mxu0 0
    %242 = vmatpush1.bf16.msra.mxu0 0
    %243 = vmatprep.subr.bf16.mxu0 0
    %244 = vmatpush1.bf16.msra.mxu0 0
    %245 = vmatprep.subr.bf16.mxu0 0
    %246 = vmatpush1.bf16.msra.mxu0 0
    %247 = vmatprep.subr.bf16.mxu0 0
    %248 = vmatpush1.bf16.msra.mxu0 0
    %249 = vmatprep.subr.bf16.mxu0 0
    %250 = vmatpush1.bf16.msra.mxu0 0
    %251 = vmatprep.subr.bf16.mxu0 0
    %252 = vmatpush1.bf16.msra.mxu0 0
    %253 = vmatprep.subr.bf16.mxu0 0
    %254 = vmatpush1.bf16.msra.mxu0 0
    %255 = vmatprep.mubr.bf16.mxu0 0
    %256 = vmatmul.mubr.bf16.gmra.mrb[0].mxu0 %v149
    %v257 = vpop.f32.mrb[0].mxu0
    %v258 = vadd.f32 %v173, %v257
    %v259 = vpop.f32.mrb[0].mxu0
    %v260 = vpop.f32.mrb[0].mxu0
    %v261 = vpop.f32.mrb[0].mxu0
    %262 = vdwg.mxu0
    %v263 = vmax.f32 %v258, 0.0
    %v264 = vadd.f32 %v148, %v263
    %265 = vst [vmem:[#allocation2] sm:$0xff] %v264
    %v266 = vld [vmem:[#allocation2] sm:$0xff]
    %v267 = vpack.c.bf16 %v266, %v266
    %s268 = scalar_lea.vmem [#allocation3], 128
    %v269 = vld [vmem:[%s268] sm:$0xf]
    %v270 = vld [vmem:[%s268 + $0x4] sm:$0xf]
    %v271 = vld [vmem:[%s268 + $0x8] sm:$0xf]
    %v272 = vld [vmem:[%s268 + $0xc] sm:$0xf]
    %v273 = vld [vmem:[%s268 + $0x10] sm:$0xf]
    %v274 = vld [vmem:[%s268 + $0x14] sm:$0xf]
    %v275 = vld [vmem:[%s268 + $0x18] sm:$0xf]
    %v276 = vld [vmem:[%s268 + $0x1c] sm:$0xf]
    %v277 = vld [vmem:[%s268 + $0x20] sm:$0xf]
    %v278 = vld [vmem:[%s268 + $0x24] sm:$0xf]
    %v279 = vld [vmem:[%s268 + $0x28] sm:$0xf]
    %v280 = vld [vmem:[%s268 + $0x2c] sm:$0xf]
    %v281 = vld [vmem:[%s268 + $0x30] sm:$0xf]
    %v282 = vld [vmem:[%s268 + $0x34] sm:$0xf]
    %v283 = vld [vmem:[%s268 + $0x38] sm:$0xf]
    %v284 = vld [vmem:[%s268 + $0x3c] sm:$0xf]
    %s285 = scalar_lea.vmem %s2, 2
    %v286 = vld [vmem:[%s285] sm:$0x1]
    %v288 = vlaneseq
    %v289 = vshrl.u32 %v288, 7
    %v290 = vsub.s32 0, %v289
    %v291 = vrot.slane %v286, %v290
    %v309 = vunpack.c.l.b16 %v269
    %v310 = vunpack.c.l.b16 %v270
    %v311 = vunpack.c.l.b16 %v271
    %v312 = vunpack.c.l.b16 %v272
    %v313 = vunpack.c.l.b16 %v273
    %v314 = vunpack.c.l.b16 %v274
    %v315 = vunpack.c.l.b16 %v275
    %v316 = vunpack.c.l.b16 %v276
    %v317 = vunpack.c.l.b16 %v277
    %v318 = vunpack.c.l.b16 %v278
    %v319 = vunpack.c.l.b16 %v279
    %v320 = vunpack.c.l.b16 %v280
    %v321 = vunpack.c.l.b16 %v281
    %v322 = vunpack.c.l.b16 %v282
    %v323 = vunpack.c.l.b16 %v283
    %v324 = vunpack.c.l.b16 %v284
    %v325 = vpack.c.b16 %v310, %v309
    %v326 = vpack.c.b16 %v312, %v311
    %v327 = vpack.c.b16 %v314, %v313
    %v328 = vpack.c.b16 %v316, %v315
    %v329 = vpack.c.b16 %v318, %v317
    %v330 = vpack.c.b16 %v320, %v319
    %v331 = vpack.c.b16 %v322, %v321
    %v332 = vpack.c.b16 %v324, %v323
    %341 = vmatprep.subr.bf16.mxu0 0
    %342 = vmatpush1.bf16.msra.mxu0 %v325
    %343 = vmatprep.subr.bf16.mxu0 0
    %344 = vmatpush1.bf16.msra.mxu0 %v326
    %345 = vmatprep.subr.bf16.mxu0 0
    %346 = vmatpush1.bf16.msra.mxu0 %v327
    %347 = vmatprep.subr.bf16.mxu0 0
    %348 = vmatpush1.bf16.msra.mxu0 %v328
    %349 = vmatprep.subr.bf16.mxu0 0
    %350 = vmatpush1.bf16.msra.mxu0 %v329
    %351 = vmatprep.subr.bf16.mxu0 0
    %352 = vmatpush1.bf16.msra.mxu0 %v330
    %353 = vmatprep.subr.bf16.mxu0 0
    %354 = vmatpush1.bf16.msra.mxu0 %v331
    %355 = vmatprep.subr.bf16.mxu0 0
    %356 = vmatpush1.bf16.msra.mxu0 %v332
    %357 = vmatprep.subr.bf16.mxu0 0
    %358 = vmatpush1.bf16.msra.mxu0 0
    %359 = vmatprep.subr.bf16.mxu0 0
    %360 = vmatpush1.bf16.msra.mxu0 0
    %361 = vmatprep.subr.bf16.mxu0 0
    %362 = vmatpush1.bf16.msra.mxu0 0
    %363 = vmatprep.subr.bf16.mxu0 0
    %364 = vmatpush1.bf16.msra.mxu0 0
    %365 = vmatprep.subr.bf16.mxu0 0
    %366 = vmatpush1.bf16.msra.mxu0 0
    %367 = vmatprep.subr.bf16.mxu0 0
    %368 = vmatpush1.bf16.msra.mxu0 0
    %369 = vmatprep.subr.bf16.mxu0 0
    %370 = vmatpush1.bf16.msra.mxu0 0
    %371 = vmatprep.subr.bf16.mxu0 0
    %372 = vmatpush1.bf16.msra.mxu0 0
    %373 = vmatprep.mubr.bf16.mxu0 0
    %374 = vmatmul.mubr.bf16.gmra.mrb[0].mxu0 %v267
    %v375 = vpop.f32.mrb[0].mxu0
    %v376 = vadd.f32 %v291, %v375
    %v377 = vpop.f32.mrb[0].mxu0
    %v378 = vpop.f32.mrb[0].mxu0
    %v379 = vpop.f32.mrb[0].mxu0
    %380 = vdwg.mxu0
    %v381 = vmax.f32 %v376, 0.0
    %v382 = vadd.f32 %v266, %v381
    %383 = vst [vmem:[#allocation2] sm:$0xff] %v382
    %v384 = vld [vmem:[#allocation2] sm:$0xff]
    %v385 = vpack.c.bf16 %v384, %v384
    %s386 = scalar_lea.vmem [#allocation3], 192
    %v387 = vld [vmem:[%s386] sm:$0xf]
    %v388 = vld [vmem:[%s386 + $0x4] sm:$0xf]
    %v389 = vld [vmem:[%s386 + $0x8] sm:$0xf]
    %v390 = vld [vmem:[%s386 + $0xc] sm:$0xf]
    %v391 = vld [vmem:[%s386 + $0x10] sm:$0xf]
    %v392 = vld [vmem:[%s386 + $0x14] sm:$0xf]
    %v393 = vld [vmem:[%s386 + $0x18] sm:$0xf]
    %v394 = vld [vmem:[%s386 + $0x1c] sm:$0xf]
    %v395 = vld [vmem:[%s386 + $0x20] sm:$0xf]
    %v396 = vld [vmem:[%s386 + $0x24] sm:$0xf]
    %v397 = vld [vmem:[%s386 + $0x28] sm:$0xf]
    %v398 = vld [vmem:[%s386 + $0x2c] sm:$0xf]
    %v399 = vld [vmem:[%s386 + $0x30] sm:$0xf]
    %v400 = vld [vmem:[%s386 + $0x34] sm:$0xf]
    %v401 = vld [vmem:[%s386 + $0x38] sm:$0xf]
    %v402 = vld [vmem:[%s386 + $0x3c] sm:$0xf]
    %s403 = scalar_lea.vmem %s2, 3
    %v404 = vld [vmem:[%s403] sm:$0x1]
    %v406 = vlaneseq
    %v407 = vshrl.u32 %v406, 7
    %v408 = vsub.s32 0, %v407
    %v409 = vrot.slane %v404, %v408
    %v427 = vunpack.c.l.b16 %v387
    %v428 = vunpack.c.l.b16 %v388
    %v429 = vunpack.c.l.b16 %v389
    %v430 = vunpack.c.l.b16 %v390
    %v431 = vunpack.c.l.b16 %v391
    %v432 = vunpack.c.l.b16 %v392
    %v433 = vunpack.c.l.b16 %v393
    %v434 = vunpack.c.l.b16 %v394
    %v435 = vunpack.c.l.b16 %v395
    %v436 = vunpack.c.l.b16 %v396
    %v437 = vunpack.c.l.b16 %v397
    %v438 = vunpack.c.l.b16 %v398
    %v439 = vunpack.c.l.b16 %v399
    %v440 = vunpack.c.l.b16 %v400
    %v441 = vunpack.c.l.b16 %v401
    %v442 = vunpack.c.l.b16 %v402
    %v443 = vpack.c.b16 %v428, %v427
    %v444 = vpack.c.b16 %v430, %v429
    %v445 = vpack.c.b16 %v432, %v431
    %v446 = vpack.c.b16 %v434, %v433
    %v447 = vpack.c.b16 %v436, %v435
    %v448 = vpack.c.b16 %v438, %v437
    %v449 = vpack.c.b16 %v440, %v439
    %v450 = vpack.c.b16 %v442, %v441
    %459 = vmatprep.subr.bf16.mxu0 0
    %460 = vmatpush1.bf16.msra.mxu0 %v443
    %461 = vmatprep.subr.bf16.mxu0 0
    %462 = vmatpush1.bf16.msra.mxu0 %v444
    %463 = vmatprep.subr.bf16.mxu0 0
    %464 = vmatpush1.bf16.msra.mxu0 %v445
    %465 = vmatprep.subr.bf16.mxu0 0
    %466 = vmatpush1.bf16.msra.mxu0 %v446
    %467 = vmatprep.subr.bf16.mxu0 0
    %468 = vmatpush1.bf16.msra.mxu0 %v447
    %469 = vmatprep.subr.bf16.mxu0 0
    %470 = vmatpush1.bf16.msra.mxu0 %v448
    %471 = vmatprep.subr.bf16.mxu0 0
    %472 = vmatpush1.bf16.msra.mxu0 %v449
    %473 = vmatprep.subr.bf16.mxu0 0
    %474 = vmatpush1.bf16.msra.mxu0 %v450
    %475 = vmatprep.subr.bf16.mxu0 0
    %476 = vmatpush1.bf16.msra.mxu0 0
    %477 = vmatprep.subr.bf16.mxu0 0
    %478 = vmatpush1.bf16.msra.mxu0 0
    %479 = vmatprep.subr.bf16.mxu0 0
    %480 = vmatpush1.bf16.msra.mxu0 0
    %481 = vmatprep.subr.bf16.mxu0 0
    %482 = vmatpush1.bf16.msra.mxu0 0
    %483 = vmatprep.subr.bf16.mxu0 0
    %484 = vmatpush1.bf16.msra.mxu0 0
    %485 = vmatprep.subr.bf16.mxu0 0
    %486 = vmatpush1.bf16.msra.mxu0 0
    %487 = vmatprep.subr.bf16.mxu0 0
    %488 = vmatpush1.bf16.msra.mxu0 0
    %489 = vmatprep.subr.bf16.mxu0 0
    %490 = vmatpush1.bf16.msra.mxu0 0
    %491 = vmatprep.mubr.bf16.mxu0 0
    %492 = vmatmul.mubr.bf16.gmra.mrb[0].mxu0 %v385
    %v493 = vpop.f32.mrb[0].mxu0
    %v494 = vadd.f32 %v409, %v493
    %v495 = vpop.f32.mrb[0].mxu0
    %v496 = vpop.f32.mrb[0].mxu0
    %v497 = vpop.f32.mrb[0].mxu0
    %498 = vdwg.mxu0
    %v499 = vmax.f32 %v494, 0.0
    %v500 = vadd.f32 %v384, %v499
    %501 = vst [vmem:[#allocation2] sm:$0xff] %v500
    %v502 = vld [vmem:[#allocation2] sm:$0xff]
    %v503 = vpack.c.bf16 %v502, %v502
    %s504 = scalar_lea.vmem [#allocation3], 256
    %v505 = vld [vmem:[%s504] sm:$0xf]
    %v506 = vld [vmem:[%s504 + $0x4] sm:$0xf]
    %v507 = vld [vmem:[%s504 + $0x8] sm:$0xf]
    %v508 = vld [vmem:[%s504 + $0xc] sm:$0xf]
    %v509 = vld [vmem:[%s504 + $0x10] sm:$0xf]
    %v510 = vld [vmem:[%s504 + $0x14] sm:$0xf]
    %v511 = vld [vmem:[%s504 + $0x18] sm:$0xf]
    %v512 = vld [vmem:[%s504 + $0x1c] sm:$0xf]
    %v513 = vld [vmem:[%s504 + $0x20] sm:$0xf]
    %v514 = vld [vmem:[%s504 + $0x24] sm:$0xf]
    %v515 = vld [vmem:[%s504 + $0x28] sm:$0xf]
    %v516 = vld [vmem:[%s504 + $0x2c] sm:$0xf]
    %v517 = vld [vmem:[%s504 + $0x30] sm:$0xf]
    %v518 = vld [vmem:[%s504 + $0x34] sm:$0xf]
    %v519 = vld [vmem:[%s504 + $0x38] sm:$0xf]
    %v520 = vld [vmem:[%s504 + $0x3c] sm:$0xf]
    %s521 = scalar_lea.vmem %s2, 4
    %v522 = vld [vmem:[%s521] sm:$0x1]
    %v524 = vlaneseq
    %v525 = vshrl.u32 %v524, 7
    %v526 = vsub.s32 0, %v525
    %v527 = vrot.slane %v522, %v526
    %v545 = vunpack.c.l.b16 %v505
    %v546 = vunpack.c.l.b16 %v506
    %v547 = vunpack.c.l.b16 %v507
    %v548 = vunpack.c.l.b16 %v508
    %v549 = vunpack.c.l.b16 %v509
    %v550 = vunpack.c.l.b16 %v510
    %v551 = vunpack.c.l.b16 %v511
    %v552 = vunpack.c.l.b16 %v512
    %v553 = vunpack.c.l.b16 %v513
    %v554 = vunpack.c.l.b16 %v514
    %v555 = vunpack.c.l.b16 %v515
    %v556 = vunpack.c.l.b16 %v516
    %v557 = vunpack.c.l.b16 %v517
    %v558 = vunpack.c.l.b16 %v518
    %v559 = vunpack.c.l.b16 %v519
    %v560 = vunpack.c.l.b16 %v520
    %v561 = vpack.c.b16 %v546, %v545
    %v562 = vpack.c.b16 %v548, %v547
    %v563 = vpack.c.b16 %v550, %v549
    %v564 = vpack.c.b16 %v552, %v551
    %v565 = vpack.c.b16 %v554, %v553
    %v566 = vpack.c.b16 %v556, %v555
    %v567 = vpack.c.b16 %v558, %v557
    %v568 = vpack.c.b16 %v560, %v559
    %577 = vmatprep.subr.bf16.mxu0 0
    %578 = vmatpush1.bf16.msra.mxu0 %v561
    %579 = vmatprep.subr.bf16.mxu0 0
    %580 = vmatpush1.bf16.msra.mxu0 %v562
    %581 = vmatprep.subr.bf16.mxu0 0
    %582 = vmatpush1.bf16.msra.mxu0 %v563
    %583 = vmatprep.subr.bf16.mxu0 0
    %584 = vmatpush1.bf16.msra.mxu0 %v564
    %585 = vmatprep.subr.bf16.mxu0 0
    %586 = vmatpush1.bf16.msra.mxu0 %v565
    %587 = vmatprep.subr.bf16.mxu0 0
    %588 = vmatpush1.bf16.msra.mxu0 %v566
    %589 = vmatprep.subr.bf16.mxu0 0
    %590 = vmatpush1.bf16.msra.mxu0 %v567
    %591 = vmatprep.subr.bf16.mxu0 0
    %592 = vmatpush1.bf16.msra.mxu0 %v568
    %593 = vmatprep.subr.bf16.mxu0 0
    %594 = vmatpush1.bf16.msra.mxu0 0
    %595 = vmatprep.subr.bf16.mxu0 0
    %596 = vmatpush1.bf16.msra.mxu0 0
    %597 = vmatprep.subr.bf16.mxu0 0
    %598 = vmatpush1.bf16.msra.mxu0 0
    %599 = vmatprep.subr.bf16.mxu0 0
    %600 = vmatpush1.bf16.msra.mxu0 0
    %601 = vmatprep.subr.bf16.mxu0 0
    %602 = vmatpush1.bf16.msra.mxu0 0
    %603 = vmatprep.subr.bf16.mxu0 0
    %604 = vmatpush1.bf16.msra.mxu0 0
    %605 = vmatprep.subr.bf16.mxu0 0
    %606 = vmatpush1.bf16.msra.mxu0 0
    %607 = vmatprep.subr.bf16.mxu0 0
    %608 = vmatpush1.bf16.msra.mxu0 0
    %609 = vmatprep.mubr.bf16.mxu0 0
    %610 = vmatmul.mubr.bf16.gmra.mrb[0].mxu0 %v503
    %v611 = vpop.f32.mrb[0].mxu0
    %v612 = vadd.f32 %v527, %v611
    %v613 = vpop.f32.mrb[0].mxu0
    %v614 = vpop.f32.mrb[0].mxu0
    %v615 = vpop.f32.mrb[0].mxu0
    %616 = vdwg.mxu0
    %v617 = vmax.f32 %v612, 0.0
    %v618 = vadd.f32 %v502, %v617
    %619 = vst [vmem:[#allocation2] sm:$0xff] %v618
    %v620 = vld [vmem:[#allocation2] sm:$0xff]
    %v621 = vpack.c.bf16 %v620, %v620
    %s622 = scalar_lea.vmem [#allocation3], 320
    %v623 = vld [vmem:[%s622] sm:$0xf]
    %v624 = vld [vmem:[%s622 + $0x4] sm:$0xf]
    %v625 = vld [vmem:[%s622 + $0x8] sm:$0xf]
    %v626 = vld [vmem:[%s622 + $0xc] sm:$0xf]
    %v627 = vld [vmem:[%s622 + $0x10] sm:$0xf]
    %v628 = vld [vmem:[%s622 + $0x14] sm:$0xf]
    %v629 = vld [vmem:[%s622 + $0x18] sm:$0xf]
    %v630 = vld [vmem:[%s622 + $0x1c] sm:$0xf]
    %v631 = vld [vmem:[%s622 + $0x20] sm:$0xf]
    %v632 = vld [vmem:[%s622 + $0x24] sm:$0xf]
    %v633 = vld [vmem:[%s622 + $0x28] sm:$0xf]
    %v634 = vld [vmem:[%s622 + $0x2c] sm:$0xf]
    %v635 = vld [vmem:[%s622 + $0x30] sm:$0xf]
    %v636 = vld [vmem:[%s622 + $0x34] sm:$0xf]
    %v637 = vld [vmem:[%s622 + $0x38] sm:$0xf]
    %v638 = vld [vmem:[%s622 + $0x3c] sm:$0xf]
    %s639 = scalar_lea.vmem %s2, 5
    %v640 = vld [vmem:[%s639] sm:$0x1]
    %v642 = vlaneseq
    %v643 = vshrl.u32 %v642, 7
    %v644 = vsub.s32 0, %v643
    %v645 = vrot.slane %v640, %v644
    %v663 = vunpack.c.l.b16 %v623
    %v664 = vunpack.c.l.b16 %v624
    %v665 = vunpack.c.l.b16 %v625
    %v666 = vunpack.c.l.b16 %v626
    %v667 = vunpack.c.l.b16 %v627
    %v668 = vunpack.c.l.b16 %v628
    %v669 = vunpack.c.l.b16 %v629
    %v670 = vunpack.c.l.b16 %v630
    %v671 = vunpack.c.l.b16 %v631
    %v672 = vunpack.c.l.b16 %v632
    %v673 = vunpack.c.l.b16 %v633
    %v674 = vunpack.c.l.b16 %v634
    %v675 = vunpack.c.l.b16 %v635
    %v676 = vunpack.c.l.b16 %v636
    %v677 = vunpack.c.l.b16 %v637
    %v678 = vunpack.c.l.b16 %v638
    %v679 = vpack.c.b16 %v664, %v663
    %v680 = vpack.c.b16 %v666, %v665
    %v681 = vpack.c.b16 %v668, %v667
    %v682 = vpack.c.b16 %v670, %v669
    %v683 = vpack.c.b16 %v672, %v671
    %v684 = vpack.c.b16 %v674, %v673
    %v685 = vpack.c.b16 %v676, %v675
    %v686 = vpack.c.b16 %v678, %v677
    %695 = vmatprep.subr.bf16.mxu0 0
    %696 = vmatpush1.bf16.msra.mxu0 %v679
    %697 = vmatprep.subr.bf16.mxu0 0
    %698 = vmatpush1.bf16.msra.mxu0 %v680
    %699 = vmatprep.subr.bf16.mxu0 0
    %700 = vmatpush1.bf16.msra.mxu0 %v681
    %701 = vmatprep.subr.bf16.mxu0 0
    %702 = vmatpush1.bf16.msra.mxu0 %v682
    %703 = vmatprep.subr.bf16.mxu0 0
    %704 = vmatpush1.bf16.msra.mxu0 %v683
    %705 = vmatprep.subr.bf16.mxu0 0
    %706 = vmatpush1.bf16.msra.mxu0 %v684
    %707 = vmatprep.subr.bf16.mxu0 0
    %708 = vmatpush1.bf16.msra.mxu0 %v685
    %709 = vmatprep.subr.bf16.mxu0 0
    %710 = vmatpush1.bf16.msra.mxu0 %v686
    %711 = vmatprep.subr.bf16.mxu0 0
    %712 = vmatpush1.bf16.msra.mxu0 0
    %713 = vmatprep.subr.bf16.mxu0 0
    %714 = vmatpush1.bf16.msra.mxu0 0
    %715 = vmatprep.subr.bf16.mxu0 0
    %716 = vmatpush1.bf16.msra.mxu0 0
    %717 = vmatprep.subr.bf16.mxu0 0
    %718 = vmatpush1.bf16.msra.mxu0 0
    %719 = vmatprep.subr.bf16.mxu0 0
    %720 = vmatpush1.bf16.msra.mxu0 0
    %721 = vmatprep.subr.bf16.mxu0 0
    %722 = vmatpush1.bf16.msra.mxu0 0
    %723 = vmatprep.subr.bf16.mxu0 0
    %724 = vmatpush1.bf16.msra.mxu0 0
    %725 = vmatprep.subr.bf16.mxu0 0
    %726 = vmatpush1.bf16.msra.mxu0 0
    %727 = vmatprep.mubr.bf16.mxu0 0
    %728 = vmatmul.mubr.bf16.gmra.mrb[0].mxu0 %v621
    %v729 = vpop.f32.mrb[0].mxu0
    %v730 = vadd.f32 %v645, %v729
    %v731 = vpop.f32.mrb[0].mxu0
    %v732 = vpop.f32.mrb[0].mxu0
    %v733 = vpop.f32.mrb[0].mxu0
    %734 = vdwg.mxu0
    %v735 = vmax.f32 %v730, 0.0
    %v736 = vadd.f32 %v620, %v735
    %737 = vst [vmem:[#allocation2] sm:$0xff] %v736
    %v738 = vld [vmem:[#allocation2] sm:$0xff]
    %v739 = vpack.c.bf16 %v738, %v738
    %s740 = scalar_lea.vmem [#allocation3], 384
    %v741 = vld [vmem:[%s740] sm:$0xf]
    %v742 = vld [vmem:[%s740 + $0x4] sm:$0xf]
    %v743 = vld [vmem:[%s740 + $0x8] sm:$0xf]
    %v744 = vld [vmem:[%s740 + $0xc] sm:$0xf]
    %v745 = vld [vmem:[%s740 + $0x10] sm:$0xf]
    %v746 = vld [vmem:[%s740 + $0x14] sm:$0xf]
    %v747 = vld [vmem:[%s740 + $0x18] sm:$0xf]
    %v748 = vld [vmem:[%s740 + $0x1c] sm:$0xf]
    %v749 = vld [vmem:[%s740 + $0x20] sm:$0xf]
    %v750 = vld [vmem:[%s740 + $0x24] sm:$0xf]
    %v751 = vld [vmem:[%s740 + $0x28] sm:$0xf]
    %v752 = vld [vmem:[%s740 + $0x2c] sm:$0xf]
    %v753 = vld [vmem:[%s740 + $0x30] sm:$0xf]
    %v754 = vld [vmem:[%s740 + $0x34] sm:$0xf]
    %v755 = vld [vmem:[%s740 + $0x38] sm:$0xf]
    %v756 = vld [vmem:[%s740 + $0x3c] sm:$0xf]
    %s757 = scalar_lea.vmem %s2, 6
    %v758 = vld [vmem:[%s757] sm:$0x1]
    %v760 = vlaneseq
    %v761 = vshrl.u32 %v760, 7
    %v762 = vsub.s32 0, %v761
    %v763 = vrot.slane %v758, %v762
    %v781 = vunpack.c.l.b16 %v741
    %v782 = vunpack.c.l.b16 %v742
    %v783 = vunpack.c.l.b16 %v743
    %v784 = vunpack.c.l.b16 %v744
    %v785 = vunpack.c.l.b16 %v745
    %v786 = vunpack.c.l.b16 %v746
    %v787 = vunpack.c.l.b16 %v747
    %v788 = vunpack.c.l.b16 %v748
    %v789 = vunpack.c.l.b16 %v749
    %v790 = vunpack.c.l.b16 %v750
    %v791 = vunpack.c.l.b16 %v751
    %v792 = vunpack.c.l.b16 %v752
    %v793 = vunpack.c.l.b16 %v753
    %v794 = vunpack.c.l.b16 %v754
    %v795 = vunpack.c.l.b16 %v755
    %v796 = vunpack.c.l.b16 %v756
    %v797 = vpack.c.b16 %v782, %v781
    %v798 = vpack.c.b16 %v784, %v783
    %v799 = vpack.c.b16 %v786, %v785
    %v800 = vpack.c.b16 %v788, %v787
    %v801 = vpack.c.b16 %v790, %v789
    %v802 = vpack.c.b16 %v792, %v791
    %v803 = vpack.c.b16 %v794, %v793
    %v804 = vpack.c.b16 %v796, %v795
    %813 = vmatprep.subr.bf16.mxu0 0
    %814 = vmatpush1.bf16.msra.mxu0 %v797
    %815 = vmatprep.subr.bf16.mxu0 0
    %816 = vmatpush1.bf16.msra.mxu0 %v798
    %817 = vmatprep.subr.bf16.mxu0 0
    %818 = vmatpush1.bf16.msra.mxu0 %v799
    %819 = vmatprep.subr.bf16.mxu0 0
    %820 = vmatpush1.bf16.msra.mxu0 %v800
    %821 = vmatprep.subr.bf16.mxu0 0
    %822 = vmatpush1.bf16.msra.mxu0 %v801
    %823 = vmatprep.subr.bf16.mxu0 0
    %824 = vmatpush1.bf16.msra.mxu0 %v802
    %825 = vmatprep.subr.bf16.mxu0 0
    %826 = vmatpush1.bf16.msra.mxu0 %v803
    %827 = vmatprep.subr.bf16.mxu0 0
    %828 = vmatpush1.bf16.msra.mxu0 %v804
    %829 = vmatprep.subr.bf16.mxu0 0
    %830 = vmatpush1.bf16.msra.mxu0 0
    %831 = vmatprep.subr.bf16.mxu0 0
    %832 = vmatpush1.bf16.msra.mxu0 0
    %833 = vmatprep.subr.bf16.mxu0 0
    %834 = vmatpush1.bf16.msra.mxu0 0
    %835 = vmatprep.subr.bf16.mxu0 0
    %836 = vmatpush1.bf16.msra.mxu0 0
    %837 = vmatprep.subr.bf16.mxu0 0
    %838 = vmatpush1.bf16.msra.mxu0 0
    %839 = vmatprep.subr.bf16.mxu0 0
    %840 = vmatpush1.bf16.msra.mxu0 0
    %841 = vmatprep.subr.bf16.mxu0 0
    %842 = vmatpush1.bf16.msra.mxu0 0
    %843 = vmatprep.subr.bf16.mxu0 0
    %844 = vmatpush1.bf16.msra.mxu0 0
    %845 = vmatprep.mubr.bf16.mxu0 0
    %846 = vmatmul.mubr.bf16.gmra.mrb[0].mxu0 %v739
    %v847 = vpop.f32.mrb[0].mxu0
    %v848 = vadd.f32 %v763, %v847
    %v849 = vpop.f32.mrb[0].mxu0
    %v850 = vpop.f32.mrb[0].mxu0
    %v851 = vpop.f32.mrb[0].mxu0
    %852 = vdwg.mxu0
    %v853 = vmax.f32 %v848, 0.0
    %v854 = vadd.f32 %v738, %v853
    %855 = vst [vmem:[#allocation2] sm:$0xff] %v854
    %v856 = vld [vmem:[#allocation2] sm:$0xff]
    %v857 = vpack.c.bf16 %v856, %v856
    %s858 = scalar_lea.vmem [#allocation3], 448
    %v859 = vld [vmem:[%s858] sm:$0xf]
    %v860 = vld [vmem:[%s858 + $0x4] sm:$0xf]
    %v861 = vld [vmem:[%s858 + $0x8] sm:$0xf]
    %v862 = vld [vmem:[%s858 + $0xc] sm:$0xf]
    %v863 = vld [vmem:[%s858 + $0x10] sm:$0xf]
    %v864 = vld [vmem:[%s858 + $0x14] sm:$0xf]
    %v865 = vld [vmem:[%s858 + $0x18] sm:$0xf]
    %v866 = vld [vmem:[%s858 + $0x1c] sm:$0xf]
    %v867 = vld [vmem:[%s858 + $0x20] sm:$0xf]
    %v868 = vld [vmem:[%s858 + $0x24] sm:$0xf]
    %v869 = vld [vmem:[%s858 + $0x28] sm:$0xf]
    %v870 = vld [vmem:[%s858 + $0x2c] sm:$0xf]
    %v871 = vld [vmem:[%s858 + $0x30] sm:$0xf]
    %v872 = vld [vmem:[%s858 + $0x34] sm:$0xf]
    %v873 = vld [vmem:[%s858 + $0x38] sm:$0xf]
    %v874 = vld [vmem:[%s858 + $0x3c] sm:$0xf]
    %s875 = scalar_lea.vmem %s2, 7
    %v876 = vld [vmem:[%s875] sm:$0x1]
    %v878 = vlaneseq
    %v879 = vshrl.u32 %v878, 7
    %v880 = vsub.s32 0, %v879
    %v881 = vrot.slane %v876, %v880
    %v899 = vunpack.c.l.b16 %v859
    %v900 = vunpack.c.l.b16 %v860
    %v901 = vunpack.c.l.b16 %v861
    %v902 = vunpack.c.l.b16 %v862
    %v903 = vunpack.c.l.b16 %v863
    %v904 = vunpack.c.l.b16 %v864
    %v905 = vunpack.c.l.b16 %v865
    %v906 = vunpack.c.l.b16 %v866
    %v907 = vunpack.c.l.b16 %v867
    %v908 = vunpack.c.l.b16 %v868
    %v909 = vunpack.c.l.b16 %v869
    %v910 = vunpack.c.l.b16 %v870
    %v911 = vunpack.c.l.b16 %v871
    %v912 = vunpack.c.l.b16 %v872
    %v913 = vunpack.c.l.b16 %v873
    %v914 = vunpack.c.l.b16 %v874
    %v915 = vpack.c.b16 %v900, %v899
    %v916 = vpack.c.b16 %v902, %v901
    %v917 = vpack.c.b16 %v904, %v903
    %v918 = vpack.c.b16 %v906, %v905
    %v919 = vpack.c.b16 %v908, %v907
    %v920 = vpack.c.b16 %v910, %v909
    %v921 = vpack.c.b16 %v912, %v911
    %v922 = vpack.c.b16 %v914, %v913
    %931 = vmatprep.subr.bf16.mxu0 0
    %932 = vmatpush1.bf16.msra.mxu0 %v915
    %933 = vmatprep.subr.bf16.mxu0 0
    %934 = vmatpush1.bf16.msra.mxu0 %v916
    %935 = vmatprep.subr.bf16.mxu0 0
    %936 = vmatpush1.bf16.msra.mxu0 %v917
    %937 = vmatprep.subr.bf16.mxu0 0
    %938 = vmatpush1.bf16.msra.mxu0 %v918
    %939 = vmatprep.subr.bf16.mxu0 0
    %940 = vmatpush1.bf16.msra.mxu0 %v919
    %941 = vmatprep.subr.bf16.mxu0 0
    %942 = vmatpush1.bf16.msra.mxu0 %v920
    %943 = vmatprep.subr.bf16.mxu0 0
    %944 = vmatpush1.bf16.msra.mxu0 %v921
    %945 = vmatprep.subr.bf16.mxu0 0
    %946 = vmatpush1.bf16.msra.mxu0 %v922
    %947 = vmatprep.subr.bf16.mxu0 0
    %948 = vmatpush1.bf16.msra.mxu0 0
    %949 = vmatprep.subr.bf16.mxu0 0
    %950 = vmatpush1.bf16.msra.mxu0 0
    %951 = vmatprep.subr.bf16.mxu0 0
    %952 = vmatpush1.bf16.msra.mxu0 0
    %953 = vmatprep.subr.bf16.mxu0 0
    %954 = vmatpush1.bf16.msra.mxu0 0
    %955 = vmatprep.subr.bf16.mxu0 0
    %956 = vmatpush1.bf16.msra.mxu0 0
    %957 = vmatprep.subr.bf16.mxu0 0
    %958 = vmatpush1.bf16.msra.mxu0 0
    %959 = vmatprep.subr.bf16.mxu0 0
    %960 = vmatpush1.bf16.msra.mxu0 0
    %961 = vmatprep.subr.bf16.mxu0 0
    %962 = vmatpush1.bf16.msra.mxu0 0
    %963 = vmatprep.mubr.bf16.mxu0 0
    %964 = vmatmul.mubr.bf16.gmra.mrb[0].mxu0 %v857
    %v965 = vpop.f32.mrb[0].mxu0
    %v966 = vadd.f32 %v881, %v965
    %v967 = vpop.f32.mrb[0].mxu0
    %v968 = vpop.f32.mrb[0].mxu0
    %v969 = vpop.f32.mrb[0].mxu0
    %970 = vdwg.mxu0
    %v971 = vmax.f32 %v966, 0.0
    %v972 = vadd.f32 %v856, %v971
    %973 = vst [vmem:[#allocation2] sm:$0xff] %v972
    %v974 = vld [vmem:[#allocation2] sm:$0xff]
    %v975 = vpack.c.bf16 %v974, %v974
    %s976 = scalar_lea.vmem [#allocation3], 512
    %v977 = vld [vmem:[%s976] sm:$0xf]
    %v978 = vld [vmem:[%s976 + $0x4] sm:$0xf]
    %v979 = vld [vmem:[%s976 + $0x8] sm:$0xf]
    %v980 = vld [vmem:[%s976 + $0xc] sm:$0xf]
    %v981 = vld [vmem:[%s976 + $0x10] sm:$0xf]
    %v982 = vld [vmem:[%s976 + $0x14] sm:$0xf]
    %v983 = vld [vmem:[%s976 + $0x18] sm:$0xf]
    %v984 = vld [vmem:[%s976 + $0x1c] sm:$0xf]
    %v985 = vld [vmem:[%s976 + $0x20] sm:$0xf]
    %v986 = vld [vmem:[%s976 + $0x24] sm:$0xf]
    %v987 = vld [vmem:[%s976 + $0x28] sm:$0xf]
    %v988 = vld [vmem:[%s976 + $0x2c] sm:$0xf]
    %v989 = vld [vmem:[%s976 + $0x30] sm:$0xf]
    %v990 = vld [vmem:[%s976 + $0x34] sm:$0xf]
    %v991 = vld [vmem:[%s976 + $0x38] sm:$0xf]
    %v992 = vld [vmem:[%s976 + $0x3c] sm:$0xf]
    %s993 = scalar_lea.vmem %s2, 8
    %v994 = vld [vmem:[%s993] sm:$0x1]
    %v996 = vlaneseq
    %v997 = vshrl.u32 %v996, 7
    %v998 = vsub.s32 0, %v997
    %v999 = vrot.slane %v994, %v998
    %v1017 = vunpack.c.l.b16 %v977
    %v1018 = vunpack.c.l.b16 %v978
    %v1019 = vunpack.c.l.b16 %v979
    %v1020 = vunpack.c.l.b16 %v980
    %v1021 = vunpack.c.l.b16 %v981
    %v1022 = vunpack.c.l.b16 %v982
    %v1023 = vunpack.c.l.b16 %v983
    %v1024 = vunpack.c.l.b16 %v984
    %v1025 = vunpack.c.l.b16 %v985
    %v1026 = vunpack.c.l.b16 %v986
    %v1027 = vunpack.c.l.b16 %v987
    %v1028 = vunpack.c.l.b16 %v988
    %v1029 = vunpack.c.l.b16 %v989
    %v1030 = vunpack.c.l.b16 %v990
    %v1031 = vunpack.c.l.b16 %v991
    %v1032 = vunpack.c.l.b16 %v992
    %v1033 = vpack.c.b16 %v1018, %v1017
    %v1034 = vpack.c.b16 %v1020, %v1019
    %v1035 = vpack.c.b16 %v1022, %v1021
    %v1036 = vpack.c.b16 %v1024, %v1023
    %v1037 = vpack.c.b16 %v1026, %v1025
    %v1038 = vpack.c.b16 %v1028, %v1027
    %v1039 = vpack.c.b16 %v1030, %v1029
    %v1040 = vpack.c.b16 %v1032, %v1031
    %1049 = vmatprep.subr.bf16.mxu0 0
    %1050 = vmatpush1.bf16.msra.mxu0 %v1033
    %1051 = vmatprep.subr.bf16.mxu0 0
    %1052 = vmatpush1.bf16.msra.mxu0 %v1034
    %1053 = vmatprep.subr.bf16.mxu0 0
    %1054 = vmatpush1.bf16.msra.mxu0 %v1035
    %1055 = vmatprep.subr.bf16.mxu0 0
    %1056 = vmatpush1.bf16.msra.mxu0 %v1036
    %1057 = vmatprep.subr.bf16.mxu0 0
    %1058 = vmatpush1.bf16.msra.mxu0 %v1037
    %1059 = vmatprep.subr.bf16.mxu0 0
    %1060 = vmatpush1.bf16.msra.mxu0 %v1038
    %1061 = vmatprep.subr.bf16.mxu0 0
    %1062 = vmatpush1.bf16.msra.mxu0 %v1039
    %1063 = vmatprep.subr.bf16.mxu0 0
    %1064 = vmatpush1.bf16.msra.mxu0 %v1040
    %1065 = vmatprep.subr.bf16.mxu0 0
    %1066 = vmatpush1.bf16.msra.mxu0 0
    %1067 = vmatprep.subr.bf16.mxu0 0
    %1068 = vmatpush1.bf16.msra.mxu0 0
    %1069 = vmatprep.subr.bf16.mxu0 0
    %1070 = vmatpush1.bf16.msra.mxu0 0
    %1071 = vmatprep.subr.bf16.mxu0 0
    %1072 = vmatpush1.bf16.msra.mxu0 0
    %1073 = vmatprep.subr.bf16.mxu0 0
    %1074 = vmatpush1.bf16.msra.mxu0 0
    %1075 = vmatprep.subr.bf16.mxu0 0
    %1076 = vmatpush1.bf16.msra.mxu0 0
    %1077 = vmatprep.subr.bf16.mxu0 0
    %1078 = vmatpush1.bf16.msra.mxu0 0
    %1079 = vmatprep.subr.bf16.mxu0 0
    %1080 = vmatpush1.bf16.msra.mxu0 0
    %1081 = vmatprep.mubr.bf16.mxu0 0
    %1082 = vmatmul.mubr.bf16.gmra.mrb[0].mxu0 %v975
    %v1083 = vpop.f32.mrb[0].mxu0
    %v1084 = vadd.f32 %v999, %v1083
    %v1085 = vpop.f32.mrb[0].mxu0
    %v1086 = vpop.f32.mrb[0].mxu0
    %v1087 = vpop.f32.mrb[0].mxu0
    %1088 = vdwg.mxu0
    %v1089 = vmax.f32 %v1084, 0.0
    %v1090 = vadd.f32 %v974, %v1089
    %1091 = vst [vmem:[#allocation2] sm:$0xff] %v1090
    %v1092 = vld [vmem:[#allocation2] sm:$0xff]
    %v1093 = vpack.c.bf16 %v1092, %v1092
    %s1094 = scalar_lea.vmem [#allocation3], 576
    %v1095 = vld [vmem:[%s1094] sm:$0xf]
    %v1096 = vld [vmem:[%s1094 + $0x4] sm:$0xf]
    %v1097 = vld [vmem:[%s1094 + $0x8] sm:$0xf]
    %v1098 = vld [vmem:[%s1094 + $0xc] sm:$0xf]
    %v1099 = vld [vmem:[%s1094 + $0x10] sm:$0xf]
    %v1100 = vld [vmem:[%s1094 + $0x14] sm:$0xf]
    %v1101 = vld [vmem:[%s1094 + $0x18] sm:$0xf]
    %v1102 = vld [vmem:[%s1094 + $0x1c] sm:$0xf]
    %v1103 = vld [vmem:[%s1094 + $0x20] sm:$0xf]
    %v1104 = vld [vmem:[%s1094 + $0x24] sm:$0xf]
    %v1105 = vld [vmem:[%s1094 + $0x28] sm:$0xf]
    %v1106 = vld [vmem:[%s1094 + $0x2c] sm:$0xf]
    %v1107 = vld [vmem:[%s1094 + $0x30] sm:$0xf]
    %v1108 = vld [vmem:[%s1094 + $0x34] sm:$0xf]
    %v1109 = vld [vmem:[%s1094 + $0x38] sm:$0xf]
    %v1110 = vld [vmem:[%s1094 + $0x3c] sm:$0xf]
    %s1111 = scalar_lea.vmem %s2, 9
    %v1112 = vld [vmem:[%s1111] sm:$0x1]
    %v1114 = vlaneseq
    %v1115 = vshrl.u32 %v1114, 7
    %v1116 = vsub.s32 0, %v1115
    %v1117 = vrot.slane %v1112, %v1116
    %v1135 = vunpack.c.l.b16 %v1095
    %v1136 = vunpack.c.l.b16 %v1096
    %v1137 = vunpack.c.l.b16 %v1097
    %v1138 = vunpack.c.l.b16 %v1098
    %v1139 = vunpack.c.l.b16 %v1099
    %v1140 = vunpack.c.l.b16 %v1100
    %v1141 = vunpack.c.l.b16 %v1101
    %v1142 = vunpack.c.l.b16 %v1102
    %v1143 = vunpack.c.l.b16 %v1103
    %v1144 = vunpack.c.l.b16 %v1104
    %v1145 = vunpack.c.l.b16 %v1105
    %v1146 = vunpack.c.l.b16 %v1106
    %v1147 = vunpack.c.l.b16 %v1107
    %v1148 = vunpack.c.l.b16 %v1108
    %v1149 = vunpack.c.l.b16 %v1109
    %v1150 = vunpack.c.l.b16 %v1110
    %v1151 = vpack.c.b16 %v1136, %v1135
    %v1152 = vpack.c.b16 %v1138, %v1137
    %v1153 = vpack.c.b16 %v1140, %v1139
    %v1154 = vpack.c.b16 %v1142, %v1141
    %v1155 = vpack.c.b16 %v1144, %v1143
    %v1156 = vpack.c.b16 %v1146, %v1145
    %v1157 = vpack.c.b16 %v1148, %v1147
    %v1158 = vpack.c.b16 %v1150, %v1149
    %1167 = vmatprep.subr.bf16.mxu0 0
    %1168 = vmatpush1.bf16.msra.mxu0 %v1151
    %1169 = vmatprep.subr.bf16.mxu0 0
    %1170 = vmatpush1.bf16.msra.mxu0 %v1152
    %1171 = vmatprep.subr.bf16.mxu0 0
    %1172 = vmatpush1.bf16.msra.mxu0 %v1153
    %1173 = vmatprep.subr.bf16.mxu0 0
    %1174 = vmatpush1.bf16.msra.mxu0 %v1154
    %1175 = vmatprep.subr.bf16.mxu0 0
    %1176 = vmatpush1.bf16.msra.mxu0 %v1155
    %1177 = vmatprep.subr.bf16.mxu0 0
    %1178 = vmatpush1.bf16.msra.mxu0 %v1156
    %1179 = vmatprep.subr.bf16.mxu0 0
    %1180 = vmatpush1.bf16.msra.mxu0 %v1157
    %1181 = vmatprep.subr.bf16.mxu0 0
    %1182 = vmatpush1.bf16.msra.mxu0 %v1158
    %1183 = vmatprep.subr.bf16.mxu0 0
    %1184 = vmatpush1.bf16.msra.mxu0 0
    %1185 = vmatprep.subr.bf16.mxu0 0
    %1186 = vmatpush1.bf16.msra.mxu0 0
    %1187 = vmatprep.subr.bf16.mxu0 0
    %1188 = vmatpush1.bf16.msra.mxu0 0
    %1189 = vmatprep.subr.bf16.mxu0 0
    %1190 = vmatpush1.bf16.msra.mxu0 0
    %1191 = vmatprep.subr.bf16.mxu0 0
    %1192 = vmatpush1.bf16.msra.mxu0 0
    %1193 = vmatprep.subr.bf16.mxu0 0
    %1194 = vmatpush1.bf16.msra.mxu0 0
    %1195 = vmatprep.subr.bf16.mxu0 0
    %1196 = vmatpush1.bf16.msra.mxu0 0
    %1197 = vmatprep.subr.bf16.mxu0 0
    %1198 = vmatpush1.bf16.msra.mxu0 0
    %1199 = vmatprep.mubr.bf16.mxu0 0
    %1200 = vmatmul.mubr.bf16.gmra.mrb[0].mxu0 %v1093
    %v1201 = vpop.f32.mrb[0].mxu0
    %v1202 = vadd.f32 %v1117, %v1201
    %v1203 = vpop.f32.mrb[0].mxu0
    %v1204 = vpop.f32.mrb[0].mxu0
    %v1205 = vpop.f32.mrb[0].mxu0
    %1206 = vdwg.mxu0
    %v1207 = vmax.f32 %v1202, 0.0
    %v1208 = vadd.f32 %v1092, %v1207
    %1209 = vst [vmem:[#allocation2] sm:$0xff] %v1208
    %v1210 = vld [vmem:[#allocation2] sm:$0xff]
    %1211 = vst [vmem:[%s3] sm:$0xff] %v1210
    // Predicated region
    $region18: #{dense_jungle_forward.1} parent=1 // pred_check
      _
    $region19: #{dense_jungle_forward.1} parent=1 // pred_check_branch
      %1213 = sbr.rel (0) target = $region21
    $region20: #{dense_jungle_forward.1} parent=1 // pred_region
      _
    $region21: #{dense_jungle_forward.1} parent=1 // pred_fallthru
      _
    // Predicated region
    $region22: #{dense_jungle_forward.1} parent=1 // pred_check
      _
    $region23: #{dense_jungle_forward.1} parent=1 // pred_check_branch
      %1215 = sbr.rel (0) target = $region25
    $region24: #{dense_jungle_forward.1} parent=1 // pred_region
      _
    $region25: #{dense_jungle_forward.1} parent=1 // pred_fallthru
      _
    %1216 = vsyncpa [#allocation4], 1

</llo_original>
